<compile_context>
chip_gen: v5e
topology: v5e:2x2
jax: 0.10.0
libtpu: 0.0.40
codegen_flags: <defaults>
</compile_context>

<pallas_src>
import math

import jax
import jax.numpy as jnp
from jax.experimental import pallas as pl
from jax.experimental.pallas import tpu as pltpu


_VMEM_LIMIT = 32 * 1024 * 1024


# ----------------------------------------------------------------------------
# In-kernel helpers
# ----------------------------------------------------------------------------
def _conv3x3s2_acc(xv, wA_ref, wB_ref, Ho, Wo, Cin, Co):
    """3x3 / stride-2 / pad-1 conv as 6 accumulating MXU dots.

    xv: (Ho+1, 2, Wo+1, 2*Cin) bf16 -- padded input with rows/cols regrouped
        into (pair, parity): xv[a, p, b, q*Cin + c] == x_pad[2a+p, 2b+q, c].
    wA_ref: (3, 2*Cin, Co) -- taps kw=0,1 stacked along the input axis.
    wB_ref: (3,   Cin, Co) -- tap  kw=2.
    Returns f32 accumulator of shape (Ho*Wo, Co).
    """
    M = Ho * Wo
    acc = jnp.zeros((M, Co), jnp.float32)
    for kh in range(3):
        dh, qh = kh // 2, kh % 2
        rows = xv[dh:dh + Ho, qh]                            # (Ho, Wo+1, 2*Cin)
        # kw = 0,1 : both column parities at pair offset 0 -> one K=2*Cin dot.
        lhsA = rows[:, 0:Wo, :].reshape(M, 2 * Cin)
        # kw = 2   : even-column parity at pair offset 1  -> one K=Cin dot.
        lhsB = rows[:, 1:Wo + 1, 0:Cin].reshape(M, Cin)
        acc = acc + jnp.dot(lhsA, wA_ref[kh],
                            preferred_element_type=jnp.float32)
        acc = acc + jnp.dot(lhsB, wB_ref[kh],
                            preferred_element_type=jnp.float32)
    return acc


# ----------------------------------------------------------------------------
# Pallas kernels
# ----------------------------------------------------------------------------
def _stem1_2a_kernel(xp_ref, wA_ref, wB_ref, b1_ref, w2a_ref, b2a_ref,
                     o1_ref, o2a_ref):
    Cin = wB_ref.shape[1]
    F = wB_ref.shape[2]
    Ho = xp_ref.shape[1] - 1
    Wo = xp_ref.shape[3] - 1

    xv = xp_ref[0]                                           # (Ho+1,2,Wo+1,2Cin)
    acc = _conv3x3s2_acc(xv, wA_ref, wB_ref, Ho, Wo, Cin, F)
    y1 = jnp.maximum(acc + b1_ref[...], 0.0)                 # (Ho*Wo, F) f32
    o1_ref[0] = y1.astype(o1_ref.dtype)

    # stem2a (1x1 conv + BN + ReLU) fused into the epilogue: its input never
    # leaves VMEM.
    y2a = jnp.dot(y1.astype(jnp.bfloat16), w2a_ref[...],
                  preferred_element_type=jnp.float32)
    y2a = jnp.maximum(y2a + b2a_ref[...], 0.0)
    o2a_ref[0] = y2a.astype(o2a_ref.dtype)


def _stem2b_kernel(xp_ref, wA_ref, wB_ref, b_ref, o_ref):
    Cin = wB_ref.shape[1]
    Co = wB_ref.shape[2]
    Ho = xp_ref.shape[1] - 1
    Wo = xp_ref.shape[3] - 1

    xv = xp_ref[0]
    acc = _conv3x3s2_acc(xv, wA_ref, wB_ref, Ho, Wo, Cin, Co)
    y = jnp.maximum(acc + b_ref[...], 0.0)
    o_ref[0] = y.astype(o_ref.dtype)


def _pool_cat_stem3_kernel(p1_ref, b2_ref, w3a_ref, w3b_ref, b3_ref, o_ref):
    Ho = p1_ref.shape[1]
    Wo = p1_ref.shape[3]
    F = p1_ref.shape[4] // 2

    # 2x2/stride-2 max pool while the stem1 tile is resident: row parity is a
    # major axis, column parity is the two F-wide lane halves.
    xv = p1_ref[0]                                           # (Ho, 2, Wo, 2F)
    m = jnp.maximum(xv[:, 0], xv[:, 1])                      # (Ho, Wo, 2F)
    branch1 = jnp.maximum(m[..., :F], m[..., F:])            # (Ho, Wo, F)

    b1f = branch1.reshape(Ho * Wo, F)
    b2f = b2_ref[0]                                          # (Ho*Wo, F)

    # Fused concat: stem3 weight split into two halves, two accumulating dots.
    acc = jnp.dot(b1f, w3a_ref[...], preferred_element_type=jnp.float32)
    acc = acc + jnp.dot(b2f, w3b_ref[...], preferred_element_type=jnp.float32)
    y = jnp.maximum(acc + b3_ref[...], 0.0)
    o_ref[0] = y.astype(o_ref.dtype)


# ----------------------------------------------------------------------------
# pallas_call wrappers
# ----------------------------------------------------------------------------
def _call_stem1_2a(xp, wA, wB, b1, w2a, b2a, Ho, Wo):
    N = xp.shape[0]
    Cin, F = wB.shape[1], wB.shape[2]
    F2 = w2a.shape[1]
    M = Ho * Wo
    flops = 2 * N * M * (9 * Cin * F + F * F2)
    bytes_accessed = sum(int(a.size) * a.dtype.itemsize
                         for a in (xp, wA, wB, b1, w2a, b2a))
    bytes_accessed += N * M * (F + F2) * 2
    return pl.pallas_call(
        _stem1_2a_kernel,
        out_shape=(jax.ShapeDtypeStruct((N, M, F), jnp.bfloat16),
                   jax.ShapeDtypeStruct((N, M, F2), jnp.bfloat16)),
        grid=(N,),
        in_specs=[
            pl.BlockSpec((1,) + xp.shape[1:], lambda n: (n, 0, 0, 0, 0)),
            pl.BlockSpec(wA.shape, lambda n: (0, 0, 0)),
            pl.BlockSpec(wB.shape, lambda n: (0, 0, 0)),
            pl.BlockSpec(b1.shape, lambda n: (0, 0)),
            pl.BlockSpec(w2a.shape, lambda n: (0, 0)),
            pl.BlockSpec(b2a.shape, lambda n: (0, 0)),
        ],
        out_specs=(pl.BlockSpec((1, M, F), lambda n: (n, 0, 0)),
                   pl.BlockSpec((1, M, F2), lambda n: (n, 0, 0))),
        compiler_params=pltpu.CompilerParams(
            dimension_semantics=("parallel",),
            vmem_limit_bytes=_VMEM_LIMIT),
        cost_estimate=pl.CostEstimate(flops=flops, transcendentals=0,
                                      bytes_accessed=bytes_accessed),
    )(xp, wA, wB, b1, w2a, b2a)


def _call_stem2b(xp, wA, wB, b, Ho, Wo):
    N = xp.shape[0]
    Cin, Co = wB.shape[1], wB.shape[2]
    M = Ho * Wo
    flops = 2 * N * M * 9 * Cin * Co
    bytes_accessed = sum(int(a.size) * a.dtype.itemsize
                         for a in (xp, wA, wB, b))
    bytes_accessed += N * M * Co * 2
    return pl.pallas_call(
        _stem2b_kernel,
        out_shape=jax.ShapeDtypeStruct((N, M, Co), jnp.bfloat16),
        grid=(N,),
        in_specs=[
            pl.BlockSpec((1,) + xp.shape[1:], lambda n: (n, 0, 0, 0, 0)),
            pl.BlockSpec(wA.shape, lambda n: (0, 0, 0)),
            pl.BlockSpec(wB.shape, lambda n: (0, 0, 0)),
            pl.BlockSpec(b.shape, lambda n: (0, 0)),
        ],
        out_specs=pl.BlockSpec((1, M, Co), lambda n: (n, 0, 0)),
        compiler_params=pltpu.CompilerParams(
            dimension_semantics=("parallel",),
            vmem_limit_bytes=_VMEM_LIMIT),
        cost_estimate=pl.CostEstimate(flops=flops, transcendentals=0,
                                      bytes_accessed=bytes_accessed),
    )(xp, wA, wB, b)


def _call_stem3(p1, b2, w3a, w3b, b3, Ho, Wo):
    N = p1.shape[0]
    F = w3a.shape[1]
    M = Ho * Wo
    flops = 4 * N * M * F * F
    bytes_accessed = sum(int(a.size) * a.dtype.itemsize
                         for a in (p1, b2, w3a, w3b, b3))
    bytes_accessed += N * M * F * 4
    return pl.pallas_call(
        _pool_cat_stem3_kernel,
        out_shape=jax.ShapeDtypeStruct((N, M, F), jnp.float32),
        grid=(N,),
        in_specs=[
            pl.BlockSpec((1,) + p1.shape[1:], lambda n: (n, 0, 0, 0, 0)),
            pl.BlockSpec((1,) + b2.shape[1:], lambda n: (n, 0, 0)),
            pl.BlockSpec(w3a.shape, lambda n: (0, 0)),
            pl.BlockSpec(w3b.shape, lambda n: (0, 0)),
            pl.BlockSpec(b3.shape, lambda n: (0, 0)),
        ],
        out_specs=pl.BlockSpec((1, M, F), lambda n: (n, 0, 0)),
        compiler_params=pltpu.CompilerParams(
            dimension_semantics=("parallel",),
            vmem_limit_bytes=_VMEM_LIMIT),
        cost_estimate=pl.CostEstimate(flops=flops, transcendentals=0,
                                      bytes_accessed=bytes_accessed),
    )(p1, b2, w3a, w3b, b3)


# ----------------------------------------------------------------------------
# JAX-side glue (only pads, bit-identical reshapes and the NCHW transposes)
# ----------------------------------------------------------------------------
def _pad_parity(x, Ho, Wo):
    """Zero-pad an NHWC tensor for a 3x3/s2/pad-1 conv and regroup rows/cols
    into (pair, parity): output (N, Ho+1, 2, Wo+1, 2*C), where element
    [n, a, p, b, q*C + c] == x_padded[n, 2a+p, 2b+q, c].  The reshape is a
    pure row-major regrouping (free)."""
    N, H, W, C = x.shape
    xp = jnp.pad(x, ((0, 0), (1, 2 * Ho + 1 - H), (1, 2 * Wo + 1 - W), (0, 0)))
    return xp.reshape(N, Ho + 1, 2, Wo + 1, 2 * C)


def stem_block(x_nchw, params):
    """Forward pass of _StemBlock.  Input/Output are NCHW like PyTorch."""
    x = jnp.transpose(x_nchw, (0, 2, 3, 1)).astype(jnp.bfloat16)  # NHWC, bf16
    N, H, W, _ = x.shape
    wA1, wB1, b1 = params["stem1"]
    w2a, b2a = params["stem2a"]
    wA2b, wB2b, b2b = params["stem2b"]
    w3a, w3b, b3 = params["stem3"]
    F = wB1.shape[2]
    F2 = w2a.shape[1]

    Ho1, Wo1 = (H - 1) // 2 + 1, (W - 1) // 2 + 1
    Ho2, Wo2 = (Ho1 - 1) // 2 + 1, (Wo1 - 1) // 2 + 1

    # Kernel 1: stem1 (3x3 s2) with stem2a (1x1) fused into its epilogue.
    xp = _pad_parity(x, Ho1, Wo1)
    out1, out2a = _call_stem1_2a(xp, wA1, wB1, b1, w2a, b2a, Ho1, Wo1)

    # Kernel 2: stem2b (3x3 s2) on the stem2a branch.
    xp2 = _pad_parity(out2a.reshape(N, Ho1, Wo1, F2), Ho2, Wo2)
    branch2 = _call_stem2b(xp2, wA2b, wB2b, b2b, Ho2, Wo2)

    # Kernel 3: maxpool(2,2,ceil) + channel-concat + stem3 (1x1), fused.
    o1 = out1.reshape(N, Ho1, Wo1, F)
    if (Ho1 % 2) or (Wo1 % 2):
        # MaxPool2d ceil_mode=True partial windows: pad with -inf so the max
        # ignores the padding.
        o1 = jnp.pad(o1, ((0, 0), (0, Ho1 % 2), (0, Wo1 % 2), (0, 0)),
                     constant_values=-jnp.inf)
    p1 = o1.reshape(N, Ho2, 2, Wo2, 2 * F)    # free regrouping for the pool
    out = _call_stem3(p1, branch2, w3a, w3b, b3, Ho2, Wo2)

    out = out.reshape(N, Ho2, Wo2, F)
    return jnp.transpose(out, (0, 3, 1, 2))   # -> NCHW


# ----------------------------------------------------------------------------
# Deterministic synthetic parameters (shapes from _StemBlock.__init__);
# BatchNorm is folded with inference semantics into the weights/biases.
# ----------------------------------------------------------------------------
def _folded_bn(keys, c):
    gamma = 1.0 + 0.1 * jax.random.normal(keys[0], (c,), jnp.float32)
    beta = 0.1 * jax.random.normal(keys[1], (c,), jnp.float32)
    mean = 0.1 * jax.random.normal(keys[2], (c,), jnp.float32)
    var = 0.5 + jnp.abs(jax.random.normal(keys[3], (c,), jnp.float32))
    scale = gamma * jax.lax.rsqrt(var + 1e-5)
    bias = beta - mean * scale
    return scale, bias


def _prep_conv3(key, bnkeys, ci, co):
    w = jax.random.normal(key, (3, 3, ci, co), jnp.float32) / math.sqrt(9 * ci)
    scale, bias = _folded_bn(bnkeys, co)
    w = w * scale.reshape(1, 1, 1, co)                 # fold BN scale into W
    wA = w[:, 0:2].reshape(3, 2 * ci, co).astype(jnp.bfloat16)  # taps kw=0,1
    wB = w[:, 2].astype(jnp.bfloat16)                           # tap  kw=2
    return wA, wB, bias.reshape(1, co)


def _prep_conv1(key, bnkeys, ci, co):
    w = jax.random.normal(key, (ci, co), jnp.float32) / math.sqrt(ci)
    scale, bias = _folded_bn(bnkeys, co)
    w = (w * scale.reshape(1, co)).astype(jnp.bfloat16)
    return w, bias.reshape(1, co)


def init_params(key, num_input_channels, num_init_features):
    F = num_init_features
    F2 = F // 2
    ks = jax.random.split(key, 20)
    params = {}
    params["stem1"] = _prep_conv3(ks[0], ks[1:5], num_input_channels, F)
    params["stem2a"] = _prep_conv1(ks[5], ks[6:10], F, F2)
    params["stem2b"] = _prep_conv3(ks[10], ks[11:15], F2, F)
    w3, b3 = _prep_conv1(ks[15], ks[16:20], 2 * F, F)
    params["stem3"] = (w3[:F], w3[F:], b3)   # split halves -> fused concat
    return params


# ----------------------------------------------------------------------------
# Pure-JAX reference (f32, XLA ops only) for a tolerance self-check
# ----------------------------------------------------------------------------
def _reference_stem(x_nchw, params):
    def conv3_w(wA, wB):
        ci, co = wB.shape[1], wB.shape[2]
        w01 = wA.astype(jnp.float32).reshape(3, 2, ci, co)
        w2 = wB.astype(jnp.float32).reshape(3, 1, ci, co)
        return jnp.concatenate([w01, w2], axis=1)          # (3,3,ci,co) HWIO

    def bconv3(x, wA, wB, b):
        y = jax.lax.conv_general_dilated(
            x, conv3_w(wA, wB), (2, 2), ((1, 1), (1, 1)),
            dimension_numbers=("NHWC", "HWIO", "NHWC"))
        return jnp.maximum(y + b.reshape(1, 1, 1, -1), 0.0)

    def bconv1(x, w, b):
        y = jnp.einsum("nhwc,cf->nhwf", x, w.astype(jnp.float32))
        return jnp.maximum(y + b.reshape(1, 1, 1, -1), 0.0)

    wA1, wB1, b1 = params["stem1"]
    w2a, b2a = params["stem2a"]
    wA2b, wB2b, b2b = params["stem2b"]
    w3a, w3b, b3 = params["stem3"]

    x = jnp.transpose(x_nchw, (0, 2, 3, 1))
    out = bconv3(x, wA1, wB1, b1)
    br2 = bconv1(out, w2a, b2a)
    br2 = bconv3(br2, wA2b, wB2b, b2b)
    br1 = jnp.max(jnp.stack([out[:, i::2, j::2, :]
                             for i in range(2) for j in range(2)]), axis=0)
    cat = jnp.concatenate([br1, br2], axis=-1)
    out = bconv1(cat, jnp.concatenate([w3a, w3b], axis=0), b3)
    return jnp.transpose(out, (0, 3, 1, 2))


# ----------------------------------------------------------------------------
if __name__ == "__main__":
    key = jax.random.PRNGKey(0)
    kx, kp = jax.random.split(key)

    num_input_channels = 4
    num_init_features = 32
    x = jax.random.normal(kx, (2, num_input_channels, 16, 16), jnp.float32)

    params = init_params(kp, num_input_channels, num_init_features)

    fwd = jax.jit(stem_block)
    out = jax.block_until_ready(fwd(x, params))

    assert out.shape == (2, num_init_features, 4, 4), out.shape
    assert out.dtype == jnp.float32
    assert bool(jnp.all(jnp.isfinite(out)))

    # Tolerance check against a pure-JAX f32 reference (bf16 MXU feed).
    ref = _reference_stem(x, params)
    max_err = float(jnp.max(jnp.abs(out - ref)))
    assert max_err < 0.3, max_err

    print("KERNEL_OK")
</pallas_src>

<mosaic_0001>
module attributes {stable_mosaic.version = 11 : i64} {
  func.func @_stem1_2a_kernel(%arg0: i32, %arg1: memref<1x9x2x9x8xbf16, #tpu.memory_space<vmem>>, %arg2: memref<3x8x32xbf16, #tpu.memory_space<vmem>>, %arg3: memref<3x4x32xbf16, #tpu.memory_space<vmem>>, %arg4: memref<1x32xf32, #tpu.memory_space<vmem>>, %arg5: memref<32x16xbf16, #tpu.memory_space<vmem>>, %arg6: memref<1x16xf32, #tpu.memory_space<vmem>>, %arg7: memref<1x64x32xbf16, #tpu.memory_space<vmem>>, %arg8: memref<1x64x16xbf16, #tpu.memory_space<vmem>>) attributes {dimension_semantics = [#tpu.dimension_semantics<parallel>], iteration_bounds = array<i64: 2>, scalar_prefetch = 0 : i64, scratch_operands = 0 : i64, tpu.core_type = #tpu.core_type<tc>, window_params = [{transform_indices = @transform_0, window_bounds = array<i64: 1, 9, 2, 9, 8>}, {pipeline_mode = #tpu.pipeline_mode<synchronous>, transform_indices = @transform_1, window_bounds = array<i64: 3, 8, 32>}, {pipeline_mode = #tpu.pipeline_mode<synchronous>, transform_indices = @transform_2, window_bounds = array<i64: 3, 4, 32>}, {pipeline_mode = #tpu.pipeline_mode<synchronous>, transform_indices = @transform_3, window_bounds = array<i64: 1, 32>}, {pipeline_mode = #tpu.pipeline_mode<synchronous>, transform_indices = @transform_4, window_bounds = array<i64: 32, 16>}, {pipeline_mode = #tpu.pipeline_mode<synchronous>, transform_indices = @transform_5, window_bounds = array<i64: 1, 16>}, {transform_indices = @transform_6, window_bounds = array<i64: 1, 64, 32>}, {transform_indices = @transform_7, window_bounds = array<i64: 1, 64, 16>}]} {
    %c0 = arith.constant 0 : index
    %c0_0 = arith.constant 0 : index
    %c0_1 = arith.constant 0 : index
    %c0_2 = arith.constant 0 : index
    %c0_3 = arith.constant 0 : index
    %0 = vector.load %arg1[%c0, %c0_0, %c0_1, %c0_2, %c0_3] : memref<1x9x2x9x8xbf16, #tpu.memory_space<vmem>>, vector<1x9x2x9x8xbf16>
    %1 = vector.shape_cast %0 : vector<1x9x2x9x8xbf16> to vector<9x2x9x8xbf16>
    %cst = arith.constant 0.000000e+00 : f32
    %2 = vector.broadcast %cst : f32 to vector<64x32xf32>
    %3 = vector.extract_strided_slice %1 {offsets = [0, 0, 0, 0], sizes = [8, 1, 9, 8], strides = [1, 1, 1, 1]} : vector<9x2x9x8xbf16> to vector<8x1x9x8xbf16>
    %4 = vector.shape_cast %3 : vector<8x1x9x8xbf16> to vector<8x9x8xbf16>
    %5 = vector.extract_strided_slice %4 {offsets = [0, 0, 0], sizes = [8, 8, 8], strides = [1, 1, 1]} : vector<8x9x8xbf16> to vector<8x8x8xbf16>
    %6 = vector.shape_cast %5 : vector<8x8x8xbf16> to vector<64x8xbf16>
    %7 = vector.extract_strided_slice %4 {offsets = [0, 1, 0], sizes = [8, 8, 4], strides = [1, 1, 1]} : vector<8x9x8xbf16> to vector<8x8x4xbf16>
    %8 = vector.shape_cast %7 : vector<8x8x4xbf16> to vector<64x4xbf16>
    %c0_4 = arith.constant 0 : index
    %c0_5 = arith.constant 0 : index
    %c0_6 = arith.constant 0 : index
    %9 = vector.load %arg2[%c0_4, %c0_5, %c0_6] : memref<3x8x32xbf16, #tpu.memory_space<vmem>>, vector<1x8x32xbf16>
    %10 = vector.shape_cast %9 : vector<1x8x32xbf16> to vector<8x32xbf16>
    %cst_7 = arith.constant dense<0.000000e+00> : vector<64x32xf32>
    %11 = tpu.matmul %6, %10, %cst_7 {dimension_numbers = #tpu.dot_dimension_numbers<[1], [0], [0], [1], [0, 0, 1, 1], [], []>} : vector<64x8xbf16>, vector<8x32xbf16>, vector<64x32xf32> -> vector<64x32xf32>
    %12 = arith.addf %2, %11 : vector<64x32xf32>
    %c0_8 = arith.constant 0 : index
    %c0_9 = arith.constant 0 : index
    %c0_10 = arith.constant 0 : index
    %13 = vector.load %arg3[%c0_8, %c0_9, %c0_10] : memref<3x4x32xbf16, #tpu.memory_space<vmem>>, vector<1x4x32xbf16>
    %14 = vector.shape_cast %13 : vector<1x4x32xbf16> to vector<4x32xbf16>
    %cst_11 = arith.constant dense<0.000000e+00> : vector<64x32xf32>
    %15 = tpu.matmul %8, %14, %cst_11 {dimension_numbers = #tpu.dot_dimension_numbers<[1], [0], [0], [1], [0, 0, 1, 1], [], []>} : vector<64x4xbf16>, vector<4x32xbf16>, vector<64x32xf32> -> vector<64x32xf32>
    %16 = arith.addf %12, %15 : vector<64x32xf32>
    %17 = vector.extract_strided_slice %1 {offsets = [0, 1, 0, 0], sizes = [8, 1, 9, 8], strides = [1, 1, 1, 1]} : vector<9x2x9x8xbf16> to vector<8x1x9x8xbf16>
    %18 = vector.shape_cast %17 : vector<8x1x9x8xbf16> to vector<8x9x8xbf16>
    %19 = vector.extract_strided_slice %18 {offsets = [0, 0, 0], sizes = [8, 8, 8], strides = [1, 1, 1]} : vector<8x9x8xbf16> to vector<8x8x8xbf16>
    %20 = vector.shape_cast %19 : vector<8x8x8xbf16> to vector<64x8xbf16>
    %21 = vector.extract_strided_slice %18 {offsets = [0, 1, 0], sizes = [8, 8, 4], strides = [1, 1, 1]} : vector<8x9x8xbf16> to vector<8x8x4xbf16>
    %22 = vector.shape_cast %21 : vector<8x8x4xbf16> to vector<64x4xbf16>
    %c1 = arith.constant 1 : index
    %c0_12 = arith.constant 0 : index
    %c0_13 = arith.constant 0 : index
    %23 = vector.load %arg2[%c1, %c0_12, %c0_13] : memref<3x8x32xbf16, #tpu.memory_space<vmem>>, vector<1x8x32xbf16>
    %24 = vector.shape_cast %23 : vector<1x8x32xbf16> to vector<8x32xbf16>
    %cst_14 = arith.constant dense<0.000000e+00> : vector<64x32xf32>
    %25 = tpu.matmul %20, %24, %cst_14 {dimension_numbers = #tpu.dot_dimension_numbers<[1], [0], [0], [1], [0, 0, 1, 1], [], []>} : vector<64x8xbf16>, vector<8x32xbf16>, vector<64x32xf32> -> vector<64x32xf32>
    %26 = arith.addf %16, %25 : vector<64x32xf32>
    %c1_15 = arith.constant 1 : index
    %c0_16 = arith.constant 0 : index
    %c0_17 = arith.constant 0 : index
    %27 = vector.load %arg3[%c1_15, %c0_16, %c0_17] : memref<3x4x32xbf16, #tpu.memory_space<vmem>>, vector<1x4x32xbf16>
    %28 = vector.shape_cast %27 : vector<1x4x32xbf16> to vector<4x32xbf16>
    %cst_18 = arith.constant dense<0.000000e+00> : vector<64x32xf32>
    %29 = tpu.matmul %22, %28, %cst_18 {dimension_numbers = #tpu.dot_dimension_numbers<[1], [0], [0], [1], [0, 0, 1, 1], [], []>} : vector<64x4xbf16>, vector<4x32xbf16>, vector<64x32xf32> -> vector<64x32xf32>
    %30 = arith.addf %26, %29 : vector<64x32xf32>
    %31 = vector.extract_strided_slice %1 {offsets = [1, 0, 0, 0], sizes = [8, 1, 9, 8], strides = [1, 1, 1, 1]} : vector<9x2x9x8xbf16> to vector<8x1x9x8xbf16>
    %32 = vector.shape_cast %31 : vector<8x1x9x8xbf16> to vector<8x9x8xbf16>
    %33 = vector.extract_strided_slice %32 {offsets = [0, 0, 0], sizes = [8, 8, 8], strides = [1, 1, 1]} : vector<8x9x8xbf16> to vector<8x8x8xbf16>
    %34 = vector.shape_cast %33 : vector<8x8x8xbf16> to vector<64x8xbf16>
    %35 = vector.extract_strided_slice %32 {offsets = [0, 1, 0], sizes = [8, 8, 4], strides = [1, 1, 1]} : vector<8x9x8xbf16> to vector<8x8x4xbf16>
    %36 = vector.shape_cast %35 : vector<8x8x4xbf16> to vector<64x4xbf16>
    %c2 = arith.constant 2 : index
    %c0_19 = arith.constant 0 : index
    %c0_20 = arith.constant 0 : index
    %37 = vector.load %arg2[%c2, %c0_19, %c0_20] : memref<3x8x32xbf16, #tpu.memory_space<vmem>>, vector<1x8x32xbf16>
    %38 = vector.shape_cast %37 : vector<1x8x32xbf16> to vector<8x32xbf16>
    %cst_21 = arith.constant dense<0.000000e+00> : vector<64x32xf32>
    %39 = tpu.matmul %34, %38, %cst_21 {dimension_numbers = #tpu.dot_dimension_numbers<[1], [0], [0], [1], [0, 0, 1, 1], [], []>} : vector<64x8xbf16>, vector<8x32xbf16>, vector<64x32xf32> -> vector<64x32xf32>
    %40 = arith.addf %30, %39 : vector<64x32xf32>
    %c2_22 = arith.constant 2 : index
    %c0_23 = arith.constant 0 : index
    %c0_24 = arith.constant 0 : index
    %41 = vector.load %arg3[%c2_22, %c0_23, %c0_24] : memref<3x4x32xbf16, #tpu.memory_space<vmem>>, vector<1x4x32xbf16>
    %42 = vector.shape_cast %41 : vector<1x4x32xbf16> to vector<4x32xbf16>
    %cst_25 = arith.constant dense<0.000000e+00> : vector<64x32xf32>
    %43 = tpu.matmul %36, %42, %cst_25 {dimension_numbers = #tpu.dot_dimension_numbers<[1], [0], [0], [1], [0, 0, 1, 1], [], []>} : vector<64x4xbf16>, vector<4x32xbf16>, vector<64x32xf32> -> vector<64x32xf32>
    %44 = arith.addf %40, %43 : vector<64x32xf32>
    %c0_26 = arith.constant 0 : index
    %c0_27 = arith.constant 0 : index
    %45 = vector.load %arg4[%c0_26, %c0_27] : memref<1x32xf32, #tpu.memory_space<vmem>>, vector<1x32xf32>
    %46 = vector.broadcast %45 : vector<1x32xf32> to vector<64x32xf32>
    %47 = arith.addf %44, %46 : vector<64x32xf32>
    %cst_28 = arith.constant 0.000000e+00 : f32
    %48 = vector.broadcast %cst_28 : f32 to vector<64x32xf32>
    %49 = arith.maximumf %47, %48 : vector<64x32xf32>
    %50 = arith.truncf %49 : vector<64x32xf32> to vector<64x32xbf16>
    %c0_29 = arith.constant 0 : index
    %c0_30 = arith.constant 0 : index
    %c0_31 = arith.constant 0 : index
    %51 = vector.load %arg7[%c0_29, %c0_30, %c0_31] : memref<1x64x32xbf16, #tpu.memory_space<vmem>>, vector<1x64x32xbf16>
    %52 = vector.shape_cast %51 : vector<1x64x32xbf16> to vector<64x32xbf16>
    %53 = vector.shape_cast %50 : vector<64x32xbf16> to vector<1x64x32xbf16>
    tpu.vector_store %arg7[%c0_29, %c0_30, %c0_31], %53 {strides = array<i32>} : memref<1x64x32xbf16, #tpu.memory_space<vmem>>, vector<1x64x32xbf16>,
    %54 = arith.truncf %49 : vector<64x32xf32> to vector<64x32xbf16>
    %c0_32 = arith.constant 0 : index
    %c0_33 = arith.constant 0 : index
    %55 = vector.load %arg5[%c0_32, %c0_33] : memref<32x16xbf16, #tpu.memory_space<vmem>>, vector<32x16xbf16>
    %cst_34 = arith.constant dense<0.000000e+00> : vector<64x16xf32>
    %56 = tpu.matmul %54, %55, %cst_34 {dimension_numbers = #tpu.dot_dimension_numbers<[1], [0], [0], [1], [0, 0, 1, 1], [], []>} : vector<64x32xbf16>, vector<32x16xbf16>, vector<64x16xf32> -> vector<64x16xf32>
    %c0_35 = arith.constant 0 : index
    %c0_36 = arith.constant 0 : index
    %57 = vector.load %arg6[%c0_35, %c0_36] : memref<1x16xf32, #tpu.memory_space<vmem>>, vector<1x16xf32>
    %58 = vector.broadcast %57 : vector<1x16xf32> to vector<64x16xf32>
    %59 = arith.addf %56, %58 : vector<64x16xf32>
    %cst_37 = arith.constant 0.000000e+00 : f32
    %60 = vector.broadcast %cst_37 : f32 to vector<64x16xf32>
    %61 = arith.maximumf %59, %60 : vector<64x16xf32>
    %62 = arith.truncf %61 : vector<64x16xf32> to vector<64x16xbf16>
    %c0_38 = arith.constant 0 : index
    %c0_39 = arith.constant 0 : index
    %c0_40 = arith.constant 0 : index
    %63 = vector.load %arg8[%c0_38, %c0_39, %c0_40] : memref<1x64x16xbf16, #tpu.memory_space<vmem>>, vector<1x64x16xbf16>
    %64 = vector.shape_cast %63 : vector<1x64x16xbf16> to vector<64x16xbf16>
    %65 = vector.shape_cast %62 : vector<64x16xbf16> to vector<1x64x16xbf16>
    tpu.vector_store %arg8[%c0_38, %c0_39, %c0_40], %65 {strides = array<i32>} : memref<1x64x16xbf16, #tpu.memory_space<vmem>>, vector<1x64x16xbf16>,
    return
  }
  func.func @transform_0(%arg0: i32) -> (i32, i32, i32, i32, i32) {
    %c0_i32 = arith.constant 0 : i32
    %c0_i32_0 = arith.constant 0 : i32
    %c0_i32_1 = arith.constant 0 : i32
    %c0_i32_2 = arith.constant 0 : i32
    %c0_i32_3 = arith.constant 0 : i32
    return %arg0, %c0_i32, %c0_i32_0, %c0_i32_1, %c0_i32_2 : i32, i32, i32, i32, i32
  }
  func.func @transform_1(%arg0: i32) -> (i32, i32, i32) {
    %c0_i32 = arith.constant 0 : i32
    %c0_i32_0 = arith.constant 0 : i32
    %c0_i32_1 = arith.constant 0 : i32
    %c0_i32_2 = arith.constant 0 : i32
    return %c0_i32, %c0_i32_0, %c0_i32_1 : i32, i32, i32
  }
  func.func @transform_2(%arg0: i32) -> (i32, i32, i32) {
    %c0_i32 = arith.constant 0 : i32
    %c0_i32_0 = arith.constant 0 : i32
    %c0_i32_1 = arith.constant 0 : i32
    %c0_i32_2 = arith.constant 0 : i32
    return %c0_i32, %c0_i32_0, %c0_i32_1 : i32, i32, i32
  }
  func.func @transform_3(%arg0: i32) -> (i32, i32) {
    %c0_i32 = arith.constant 0 : i32
    %c0_i32_0 = arith.constant 0 : i32
    %c0_i32_1 = arith.constant 0 : i32
    return %c0_i32, %c0_i32_0 : i32, i32
  }
  func.func @transform_4(%arg0: i32) -> (i32, i32) {
    %c0_i32 = arith.constant 0 : i32
    %c0_i32_0 = arith.constant 0 : i32
    %c0_i32_1 = arith.constant 0 : i32
    return %c0_i32, %c0_i32_0 : i32, i32
  }
  func.func @transform_5(%arg0: i32) -> (i32, i32) {
    %c0_i32 = arith.constant 0 : i32
    %c0_i32_0 = arith.constant 0 : i32
    %c0_i32_1 = arith.constant 0 : i32
    return %c0_i32, %c0_i32_0 : i32, i32
  }
  func.func @transform_6(%arg0: i32) -> (i32, i32, i32) {
    %c0_i32 = arith.constant 0 : i32
    %c0_i32_0 = arith.constant 0 : i32
    %c0_i32_1 = arith.constant 0 : i32
    return %arg0, %c0_i32, %c0_i32_0 : i32, i32, i32
  }
  func.func @transform_7(%arg0: i32) -> (i32, i32, i32) {
    %c0_i32 = arith.constant 0 : i32
    %c0_i32_0 = arith.constant 0 : i32
    %c0_i32_1 = arith.constant 0 : i32
    return %arg0, %c0_i32, %c0_i32_0 : i32, i32, i32
  }
}

module attributes {stable_mosaic.version = 11 : i64} {
  func.func @_stem2b_kernel(%arg0: i32, %arg1: memref<1x5x2x5x32xbf16, #tpu.memory_space<vmem>>, %arg2: memref<3x32x32xbf16, #tpu.memory_space<vmem>>, %arg3: memref<3x16x32xbf16, #tpu.memory_space<vmem>>, %arg4: memref<1x32xf32, #tpu.memory_space<vmem>>, %arg5: memref<1x16x32xbf16, #tpu.memory_space<vmem>>) attributes {dimension_semantics = [#tpu.dimension_semantics<parallel>], iteration_bounds = array<i64: 2>, scalar_prefetch = 0 : i64, scratch_operands = 0 : i64, tpu.core_type = #tpu.core_type<tc>, window_params = [{transform_indices = @transform_0, window_bounds = array<i64: 1, 5, 2, 5, 32>}, {pipeline_mode = #tpu.pipeline_mode<synchronous>, transform_indices = @transform_1, window_bounds = array<i64: 3, 32, 32>}, {pipeline_mode = #tpu.pipeline_mode<synchronous>, transform_indices = @transform_2, window_bounds = array<i64: 3, 16, 32>}, {pipeline_mode = #tpu.pipeline_mode<synchronous>, transform_indices = @transform_3, window_bounds = array<i64: 1, 32>}, {transform_indices = @transform_4, window_bounds = array<i64: 1, 16, 32>}]} {
    %c0 = arith.constant 0 : index
    %c0_0 = arith.constant 0 : index
    %c0_1 = arith.constant 0 : index
    %c0_2 = arith.constant 0 : index
    %c0_3 = arith.constant 0 : index
    %0 = vector.load %arg1[%c0, %c0_0, %c0_1, %c0_2, %c0_3] : memref<1x5x2x5x32xbf16, #tpu.memory_space<vmem>>, vector<1x5x2x5x32xbf16>
    %1 = vector.shape_cast %0 : vector<1x5x2x5x32xbf16> to vector<5x2x5x32xbf16>
    %cst = arith.constant 0.000000e+00 : f32
    %2 = vector.broadcast %cst : f32 to vector<16x32xf32>
    %3 = vector.extract_strided_slice %1 {offsets = [0, 0, 0, 0], sizes = [4, 1, 5, 32], strides = [1, 1, 1, 1]} : vector<5x2x5x32xbf16> to vector<4x1x5x32xbf16>
    %4 = vector.shape_cast %3 : vector<4x1x5x32xbf16> to vector<4x5x32xbf16>
    %5 = vector.extract_strided_slice %4 {offsets = [0, 0, 0], sizes = [4, 4, 32], strides = [1, 1, 1]} : vector<4x5x32xbf16> to vector<4x4x32xbf16>
    %6 = vector.shape_cast %5 : vector<4x4x32xbf16> to vector<16x32xbf16>
    %7 = vector.extract_strided_slice %4 {offsets = [0, 1, 0], sizes = [4, 4, 16], strides = [1, 1, 1]} : vector<4x5x32xbf16> to vector<4x4x16xbf16>
    %8 = vector.shape_cast %7 : vector<4x4x16xbf16> to vector<16x16xbf16>
    %c0_4 = arith.constant 0 : index
    %c0_5 = arith.constant 0 : index
    %c0_6 = arith.constant 0 : index
    %9 = vector.load %arg2[%c0_4, %c0_5, %c0_6] : memref<3x32x32xbf16, #tpu.memory_space<vmem>>, vector<1x32x32xbf16>
    %10 = vector.shape_cast %9 : vector<1x32x32xbf16> to vector<32x32xbf16>
    %cst_7 = arith.constant dense<0.000000e+00> : vector<16x32xf32>
    %11 = tpu.matmul %6, %10, %cst_7 {dimension_numbers = #tpu.dot_dimension_numbers<[1], [0], [0], [1], [0, 0, 1, 1], [], []>} : vector<16x32xbf16>, vector<32x32xbf16>, vector<16x32xf32> -> vector<16x32xf32>
    %12 = arith.addf %2, %11 : vector<16x32xf32>
    %c0_8 = arith.constant 0 : index
    %c0_9 = arith.constant 0 : index
    %c0_10 = arith.constant 0 : index
    %13 = vector.load %arg3[%c0_8, %c0_9, %c0_10] : memref<3x16x32xbf16, #tpu.memory_space<vmem>>, vector<1x16x32xbf16>
    %14 = vector.shape_cast %13 : vector<1x16x32xbf16> to vector<16x32xbf16>
    %cst_11 = arith.constant dense<0.000000e+00> : vector<16x32xf32>
    %15 = tpu.matmul %8, %14, %cst_11 {dimension_numbers = #tpu.dot_dimension_numbers<[1], [0], [0], [1], [0, 0, 1, 1], [], []>} : vector<16x16xbf16>, vector<16x32xbf16>, vector<16x32xf32> -> vector<16x32xf32>
    %16 = arith.addf %12, %15 : vector<16x32xf32>
    %17 = vector.extract_strided_slice %1 {offsets = [0, 1, 0, 0], sizes = [4, 1, 5, 32], strides = [1, 1, 1, 1]} : vector<5x2x5x32xbf16> to vector<4x1x5x32xbf16>
    %18 = vector.shape_cast %17 : vector<4x1x5x32xbf16> to vector<4x5x32xbf16>
    %19 = vector.extract_strided_slice %18 {offsets = [0, 0, 0], sizes = [4, 4, 32], strides = [1, 1, 1]} : vector<4x5x32xbf16> to vector<4x4x32xbf16>
    %20 = vector.shape_cast %19 : vector<4x4x32xbf16> to vector<16x32xbf16>
    %21 = vector.extract_strided_slice %18 {offsets = [0, 1, 0], sizes = [4, 4, 16], strides = [1, 1, 1]} : vector<4x5x32xbf16> to vector<4x4x16xbf16>
    %22 = vector.shape_cast %21 : vector<4x4x16xbf16> to vector<16x16xbf16>
    %c1 = arith.constant 1 : index
    %c0_12 = arith.constant 0 : index
    %c0_13 = arith.constant 0 : index
    %23 = vector.load %arg2[%c1, %c0_12, %c0_13] : memref<3x32x32xbf16, #tpu.memory_space<vmem>>, vector<1x32x32xbf16>
    %24 = vector.shape_cast %23 : vector<1x32x32xbf16> to vector<32x32xbf16>
    %cst_14 = arith.constant dense<0.000000e+00> : vector<16x32xf32>
    %25 = tpu.matmul %20, %24, %cst_14 {dimension_numbers = #tpu.dot_dimension_numbers<[1], [0], [0], [1], [0, 0, 1, 1], [], []>} : vector<16x32xbf16>, vector<32x32xbf16>, vector<16x32xf32> -> vector<16x32xf32>
    %26 = arith.addf %16, %25 : vector<16x32xf32>
    %c1_15 = arith.constant 1 : index
    %c0_16 = arith.constant 0 : index
    %c0_17 = arith.constant 0 : index
    %27 = vector.load %arg3[%c1_15, %c0_16, %c0_17] : memref<3x16x32xbf16, #tpu.memory_space<vmem>>, vector<1x16x32xbf16>
    %28 = vector.shape_cast %27 : vector<1x16x32xbf16> to vector<16x32xbf16>
    %cst_18 = arith.constant dense<0.000000e+00> : vector<16x32xf32>
    %29 = tpu.matmul %22, %28, %cst_18 {dimension_numbers = #tpu.dot_dimension_numbers<[1], [0], [0], [1], [0, 0, 1, 1], [], []>} : vector<16x16xbf16>, vector<16x32xbf16>, vector<16x32xf32> -> vector<16x32xf32>
    %30 = arith.addf %26, %29 : vector<16x32xf32>
    %31 = vector.extract_strided_slice %1 {offsets = [1, 0, 0, 0], sizes = [4, 1, 5, 32], strides = [1, 1, 1, 1]} : vector<5x2x5x32xbf16> to vector<4x1x5x32xbf16>
    %32 = vector.shape_cast %31 : vector<4x1x5x32xbf16> to vector<4x5x32xbf16>
    %33 = vector.extract_strided_slice %32 {offsets = [0, 0, 0], sizes = [4, 4, 32], strides = [1, 1, 1]} : vector<4x5x32xbf16> to vector<4x4x32xbf16>
    %34 = vector.shape_cast %33 : vector<4x4x32xbf16> to vector<16x32xbf16>
    %35 = vector.extract_strided_slice %32 {offsets = [0, 1, 0], sizes = [4, 4, 16], strides = [1, 1, 1]} : vector<4x5x32xbf16> to vector<4x4x16xbf16>
    %36 = vector.shape_cast %35 : vector<4x4x16xbf16> to vector<16x16xbf16>
    %c2 = arith.constant 2 : index
    %c0_19 = arith.constant 0 : index
    %c0_20 = arith.constant 0 : index
    %37 = vector.load %arg2[%c2, %c0_19, %c0_20] : memref<3x32x32xbf16, #tpu.memory_space<vmem>>, vector<1x32x32xbf16>
    %38 = vector.shape_cast %37 : vector<1x32x32xbf16> to vector<32x32xbf16>
    %cst_21 = arith.constant dense<0.000000e+00> : vector<16x32xf32>
    %39 = tpu.matmul %34, %38, %cst_21 {dimension_numbers = #tpu.dot_dimension_numbers<[1], [0], [0], [1], [0, 0, 1, 1], [], []>} : vector<16x32xbf16>, vector<32x32xbf16>, vector<16x32xf32> -> vector<16x32xf32>
    %40 = arith.addf %30, %39 : vector<16x32xf32>
    %c2_22 = arith.constant 2 : index
    %c0_23 = arith.constant 0 : index
    %c0_24 = arith.constant 0 : index
    %41 = vector.load %arg3[%c2_22, %c0_23, %c0_24] : memref<3x16x32xbf16, #tpu.memory_space<vmem>>, vector<1x16x32xbf16>
    %42 = vector.shape_cast %41 : vector<1x16x32xbf16> to vector<16x32xbf16>
    %cst_25 = arith.constant dense<0.000000e+00> : vector<16x32xf32>
    %43 = tpu.matmul %36, %42, %cst_25 {dimension_numbers = #tpu.dot_dimension_numbers<[1], [0], [0], [1], [0, 0, 1, 1], [], []>} : vector<16x16xbf16>, vector<16x32xbf16>, vector<16x32xf32> -> vector<16x32xf32>
    %44 = arith.addf %40, %43 : vector<16x32xf32>
    %c0_26 = arith.constant 0 : index
    %c0_27 = arith.constant 0 : index
    %45 = vector.load %arg4[%c0_26, %c0_27] : memref<1x32xf32, #tpu.memory_space<vmem>>, vector<1x32xf32>
    %46 = vector.broadcast %45 : vector<1x32xf32> to vector<16x32xf32>
    %47 = arith.addf %44, %46 : vector<16x32xf32>
    %cst_28 = arith.constant 0.000000e+00 : f32
    %48 = vector.broadcast %cst_28 : f32 to vector<16x32xf32>
    %49 = arith.maximumf %47, %48 : vector<16x32xf32>
    %50 = arith.truncf %49 : vector<16x32xf32> to vector<16x32xbf16>
    %c0_29 = arith.constant 0 : index
    %c0_30 = arith.constant 0 : index
    %c0_31 = arith.constant 0 : index
    %51 = vector.load %arg5[%c0_29, %c0_30, %c0_31] : memref<1x16x32xbf16, #tpu.memory_space<vmem>>, vector<1x16x32xbf16>
    %52 = vector.shape_cast %51 : vector<1x16x32xbf16> to vector<16x32xbf16>
    %53 = vector.shape_cast %50 : vector<16x32xbf16> to vector<1x16x32xbf16>
    tpu.vector_store %arg5[%c0_29, %c0_30, %c0_31], %53 {strides = array<i32>} : memref<1x16x32xbf16, #tpu.memory_space<vmem>>, vector<1x16x32xbf16>,
    return
  }
  func.func @transform_0(%arg0: i32) -> (i32, i32, i32, i32, i32) {
    %c0_i32 = arith.constant 0 : i32
    %c0_i32_0 = arith.constant 0 : i32
    %c0_i32_1 = arith.constant 0 : i32
    %c0_i32_2 = arith.constant 0 : i32
    %c0_i32_3 = arith.constant 0 : i32
    return %arg0, %c0_i32, %c0_i32_0, %c0_i32_1, %c0_i32_2 : i32, i32, i32, i32, i32
  }
  func.func @transform_1(%arg0: i32) -> (i32, i32, i32) {
    %c0_i32 = arith.constant 0 : i32
    %c0_i32_0 = arith.constant 0 : i32
    %c0_i32_1 = arith.constant 0 : i32
    %c0_i32_2 = arith.constant 0 : i32
    return %c0_i32, %c0_i32_0, %c0_i32_1 : i32, i32, i32
  }
  func.func @transform_2(%arg0: i32) -> (i32, i32, i32) {
    %c0_i32 = arith.constant 0 : i32
    %c0_i32_0 = arith.constant 0 : i32
    %c0_i32_1 = arith.constant 0 : i32
    %c0_i32_2 = arith.constant 0 : i32
    return %c0_i32, %c0_i32_0, %c0_i32_1 : i32, i32, i32
  }
  func.func @transform_3(%arg0: i32) -> (i32, i32) {
    %c0_i32 = arith.constant 0 : i32
    %c0_i32_0 = arith.constant 0 : i32
    %c0_i32_1 = arith.constant 0 : i32
    return %c0_i32, %c0_i32_0 : i32, i32
  }
  func.func @transform_4(%arg0: i32) -> (i32, i32, i32) {
    %c0_i32 = arith.constant 0 : i32
    %c0_i32_0 = arith.constant 0 : i32
    %c0_i32_1 = arith.constant 0 : i32
    return %arg0, %c0_i32, %c0_i32_0 : i32, i32, i32
  }
}

module attributes {stable_mosaic.version = 11 : i64} {
  func.func @_pool_cat_stem3_kernel(%arg0: i32, %arg1: memref<1x4x2x4x64xbf16, #tpu.memory_space<vmem>>, %arg2: memref<1x16x32xbf16, #tpu.memory_space<vmem>>, %arg3: memref<32x32xbf16, #tpu.memory_space<vmem>>, %arg4: memref<32x32xbf16, #tpu.memory_space<vmem>>, %arg5: memref<1x32xf32, #tpu.memory_space<vmem>>, %arg6: memref<1x16x32xf32, #tpu.memory_space<vmem>>) attributes {dimension_semantics = [#tpu.dimension_semantics<parallel>], iteration_bounds = array<i64: 2>, scalar_prefetch = 0 : i64, scratch_operands = 0 : i64, tpu.core_type = #tpu.core_type<tc>, window_params = [{transform_indices = @transform_0, window_bounds = array<i64: 1, 4, 2, 4, 64>}, {transform_indices = @transform_1, window_bounds = array<i64: 1, 16, 32>}, {pipeline_mode = #tpu.pipeline_mode<synchronous>, transform_indices = @transform_2, window_bounds = array<i64: 32, 32>}, {pipeline_mode = #tpu.pipeline_mode<synchronous>, transform_indices = @transform_3, window_bounds = array<i64: 32, 32>}, {pipeline_mode = #tpu.pipeline_mode<synchronous>, transform_indices = @transform_4, window_bounds = array<i64: 1, 32>}, {transform_indices = @transform_5, window_bounds = array<i64: 1, 16, 32>}]} {
    %c0 = arith.constant 0 : index
    %c0_0 = arith.constant 0 : index
    %c0_1 = arith.constant 0 : index
    %c0_2 = arith.constant 0 : index
    %c0_3 = arith.constant 0 : index
    %0 = vector.load %arg1[%c0, %c0_0, %c0_1, %c0_2, %c0_3] : memref<1x4x2x4x64xbf16, #tpu.memory_space<vmem>>, vector<1x4x2x4x64xbf16>
    %1 = vector.shape_cast %0 : vector<1x4x2x4x64xbf16> to vector<4x2x4x64xbf16>
    %2 = vector.extract_strided_slice %1 {offsets = [0, 0, 0, 0], sizes = [4, 1, 4, 64], strides = [1, 1, 1, 1]} : vector<4x2x4x64xbf16> to vector<4x1x4x64xbf16>
    %3 = vector.shape_cast %2 : vector<4x1x4x64xbf16> to vector<4x4x64xbf16>
    %4 = vector.extract_strided_slice %1 {offsets = [0, 1, 0, 0], sizes = [4, 1, 4, 64], strides = [1, 1, 1, 1]} : vector<4x2x4x64xbf16> to vector<4x1x4x64xbf16>
    %5 = vector.shape_cast %4 : vector<4x1x4x64xbf16> to vector<4x4x64xbf16>
    %6 = arith.maximumf %3, %5 : vector<4x4x64xbf16>
    %7 = vector.extract_strided_slice %6 {offsets = [0, 0, 0], sizes = [4, 4, 32], strides = [1, 1, 1]} : vector<4x4x64xbf16> to vector<4x4x32xbf16>
    %8 = vector.extract_strided_slice %6 {offsets = [0, 0, 32], sizes = [4, 4, 32], strides = [1, 1, 1]} : vector<4x4x64xbf16> to vector<4x4x32xbf16>
    %9 = arith.maximumf %7, %8 : vector<4x4x32xbf16>
    %10 = vector.shape_cast %9 : vector<4x4x32xbf16> to vector<16x32xbf16>
    %c0_4 = arith.constant 0 : index
    %c0_5 = arith.constant 0 : index
    %c0_6 = arith.constant 0 : index
    %11 = vector.load %arg2[%c0_4, %c0_5, %c0_6] : memref<1x16x32xbf16, #tpu.memory_space<vmem>>, vector<1x16x32xbf16>
    %12 = vector.shape_cast %11 : vector<1x16x32xbf16> to vector<16x32xbf16>
    %c0_7 = arith.constant 0 : index
    %c0_8 = arith.constant 0 : index
    %13 = vector.load %arg3[%c0_7, %c0_8] : memref<32x32xbf16, #tpu.memory_space<vmem>>, vector<32x32xbf16>
    %cst = arith.constant dense<0.000000e+00> : vector<16x32xf32>
    %14 = tpu.matmul %10, %13, %cst {dimension_numbers = #tpu.dot_dimension_numbers<[1], [0], [0], [1], [0, 0, 1, 1], [], []>} : vector<16x32xbf16>, vector<32x32xbf16>, vector<16x32xf32> -> vector<16x32xf32>
    %c0_9 = arith.constant 0 : index
    %c0_10 = arith.constant 0 : index
    %15 = vector.load %arg4[%c0_9, %c0_10] : memref<32x32xbf16, #tpu.memory_space<vmem>>, vector<32x32xbf16>
    %cst_11 = arith.constant dense<0.000000e+00> : vector<16x32xf32>
    %16 = tpu.matmul %12, %15, %cst_11 {dimension_numbers = #tpu.dot_dimension_numbers<[1], [0], [0], [1], [0, 0, 1, 1], [], []>} : vector<16x32xbf16>, vector<32x32xbf16>, vector<16x32xf32> -> vector<16x32xf32>
    %17 = arith.addf %14, %16 : vector<16x32xf32>
    %c0_12 = arith.constant 0 : index
    %c0_13 = arith.constant 0 : index
    %18 = vector.load %arg5[%c0_12, %c0_13] : memref<1x32xf32, #tpu.memory_space<vmem>>, vector<1x32xf32>
    %19 = vector.broadcast %18 : vector<1x32xf32> to vector<16x32xf32>
    %20 = arith.addf %17, %19 : vector<16x32xf32>
    %cst_14 = arith.constant 0.000000e+00 : f32
    %21 = vector.broadcast %cst_14 : f32 to vector<16x32xf32>
    %22 = arith.maximumf %20, %21 : vector<16x32xf32>
    %c0_15 = arith.constant 0 : index
    %c0_16 = arith.constant 0 : index
    %c0_17 = arith.constant 0 : index
    %23 = vector.load %arg6[%c0_15, %c0_16, %c0_17] : memref<1x16x32xf32, #tpu.memory_space<vmem>>, vector<1x16x32xf32>
    %24 = vector.shape_cast %23 : vector<1x16x32xf32> to vector<16x32xf32>
    %25 = vector.shape_cast %22 : vector<16x32xf32> to vector<1x16x32xf32>
    tpu.vector_store %arg6[%c0_15, %c0_16, %c0_17], %25 {strides = array<i32>} : memref<1x16x32xf32, #tpu.memory_space<vmem>>, vector<1x16x32xf32>,
    return
  }
  func.func @transform_0(%arg0: i32) -> (i32, i32, i32, i32, i32) {
    %c0_i32 = arith.constant 0 : i32
    %c0_i32_0 = arith.constant 0 : i32
    %c0_i32_1 = arith.constant 0 : i32
    %c0_i32_2 = arith.constant 0 : i32
    %c0_i32_3 = arith.constant 0 : i32
    return %arg0, %c0_i32, %c0_i32_0, %c0_i32_1, %c0_i32_2 : i32, i32, i32, i32, i32
  }
  func.func @transform_1(%arg0: i32) -> (i32, i32, i32) {
    %c0_i32 = arith.constant 0 : i32
    %c0_i32_0 = arith.constant 0 : i32
    %c0_i32_1 = arith.constant 0 : i32
    return %arg0, %c0_i32, %c0_i32_0 : i32, i32, i32
  }
  func.func @transform_2(%arg0: i32) -> (i32, i32) {
    %c0_i32 = arith.constant 0 : i32
    %c0_i32_0 = arith.constant 0 : i32
    %c0_i32_1 = arith.constant 0 : i32
    return %c0_i32, %c0_i32_0 : i32, i32
  }
  func.func @transform_3(%arg0: i32) -> (i32, i32) {
    %c0_i32 = arith.constant 0 : i32
    %c0_i32_0 = arith.constant 0 : i32
    %c0_i32_1 = arith.constant 0 : i32
    return %c0_i32, %c0_i32_0 : i32, i32
  }
  func.func @transform_4(%arg0: i32) -> (i32, i32) {
    %c0_i32 = arith.constant 0 : i32
    %c0_i32_0 = arith.constant 0 : i32
    %c0_i32_1 = arith.constant 0 : i32
    return %c0_i32, %c0_i32_0 : i32, i32
  }
  func.func @transform_5(%arg0: i32) -> (i32, i32, i32) {
    %c0_i32 = arith.constant 0 : i32
    %c0_i32_0 = arith.constant 0 : i32
    %c0_i32_1 = arith.constant 0 : i32
    return %arg0, %c0_i32, %c0_i32_0 : i32, i32, i32
  }
}

</mosaic_0001>

<llo_original>
// kernel: stem_block.5
$region0: #{stem_block.5}
  #allocation0 [shape = 'u32[]', space=smem, size = 0x4, offset = 0x4, fixed_abs, tag = 'smem constant byte address 0x4 - core index']
  #allocation1 [shape = 'u32[72,128]{1,0:T(1,128)}', space=vmem, size = 0x9000, scoped, tag = 'internal scratch']
  %s0 = inlined_call_operand.vmem [shape: bf16[2,4,2,4,64], index: 0, kind: input, shape index: {}]
  %s1 = inlined_call_operand.vmem [shape: bf16[2,16,32], index: 1, kind: input, shape index: {}]
  %s2 = inlined_call_operand.vmem [shape: bf16[32,32], index: 2, kind: input, shape index: {}]
  %s3 = inlined_call_operand.vmem [shape: bf16[32,32], index: 3, kind: input, shape index: {}]
  %s4 = inlined_call_operand.vmem [shape: f32[1,32], index: 4, kind: input, shape index: {}]
  %s5 = inlined_call_operand.hbm [shape: f32[2,16,32], index: 5, kind: output, shape index: {}]
  %s6 = sld [smem:[#allocation0]]
  $region53: #{stem_block.5} parent=0
    _
  %s8 = ssub.s32 1, %s6
  %s9 = scalar_select 0, %s8, %s6
  $region1: #{stem_block.5} parent=0
    #allocation2 [shape = 'u8[16384]{0}', space=vmem, size = 0x4000, scoped, tag = 'output window, operand 0']
    #allocation3 [shape = 's32[2]{0}', space=sflag, size = 0x8, scoped, tag = 'scoped memory for stem_block.5']
    %10 = vsyncpa [#allocation3], 0
    %s11 = scalar_lea.sflag [#allocation3], 1
    %12 = vsyncpa %s11, 0
    loop: start=0, step=1, limit=4
    $region2: #{stem_block.5} parent=1 // loop_pre_header
      _
    $region3: #{stem_block.5} parent=1 // loop_header
      %s14 = sphi 0, %s18
      %p15 = scmp.ge.s32.totalorder %s14, 4
      %s24 = sphi 0, %s26
      %s27 = sphi 0, %s24
      %s28 = sphi 0, %s27
      %s44 = sphi 0, %s28
      %s50 = sphi 0, %s52
      %s53 = sphi 0, %s50
      %s54 = sphi 0, %s53
      %s70 = sphi 0, %s54
      %s74 = sphi 0, %s74
      %s76 = sphi 0, %s74
      %s77 = sphi 0, %s76
      %s91 = sphi 0, %s77
      %s95 = sphi 0, %s95
      %s97 = sphi 0, %s95
      %s98 = sphi 0, %s97
      %s112 = sphi 0, %s98
      %s116 = sphi 0, %s116
      %s118 = sphi 0, %s116
      %s119 = sphi 0, %s118
      %s133 = sphi 0, %s119
      %s139 = sphi 0, %s141
      %s142 = sphi 0, %s139
      %s143 = sphi 0, %s142
      %s159 = sphi 0, %s143
    $region4: #{stem_block.5} parent=1 // loop_header_branch
      %17 = sbr.rel (%p15) target = $region8
    $region5: #{stem_block.5} parent=1 // loop_body
      %s19 = ssub.s32 %s14, 1
      %s20 = ssub.s32 %s14, 2
      %s21 = sadd.s32 %s14, 1
      %s22 = ssub.s32 %s14, %s21
      %p23 = scmp.eq.s32.totalorder %s22, 0
      %s25 = sadd.s32 %s24, 1
      %s26 = scalar_select %p23, %s24, %s25
      %p29 = pneg %p23
      %p30 = scmp.eq.s32.totalorder %s14, 1
      %p31 = por %p29, %p30
      %p32 = scmp.ne.s32.totalorder %s24, %s27
      %p33 = scmp.eq.s32.totalorder %s14, 0
      %p34 = por %p32, %p33
      %p35 = scmp.ne.s32.totalorder %s24, %s27
      %p36 = scmp.eq.s32.totalorder %s19, 1
      %p37 = por %p35, %p36
      %p38 = scmp.ne.s32.totalorder %s27, %s28
      %p39 = scmp.eq.s32.totalorder %s19, 0
      %p40 = por %p38, %p39
      %p41 = scmp.ne.s32.totalorder %s27, %s28
      %p42 = scmp.eq.s32.totalorder %s20, 1
      %p43 = por %p41, %p42
      %p45 = scmp.ne.s32.totalorder %s28, %s44
      %p46 = scmp.eq.s32.totalorder %s20, 0
      %p47 = por %p45, %p46
      %s48 = ssub.s32 %s14, %s21
      %p49 = scmp.eq.s32.totalorder %s48, 0
      %s51 = sadd.s32 %s50, 1
      %s52 = scalar_select %p49, %s50, %s51
      %p55 = pneg %p49
      %p56 = scmp.eq.s32.totalorder %s14, 1
      %p57 = por %p55, %p56
      %p58 = scmp.ne.s32.totalorder %s50, %s53
      %p59 = scmp.eq.s32.totalorder %s14, 0
      %p60 = por %p58, %p59
      %p61 = scmp.ne.s32.totalorder %s50, %s53
      %p62 = scmp.eq.s32.totalorder %s19, 1
      %p63 = por %p61, %p62
      %p64 = scmp.ne.s32.totalorder %s53, %s54
      %p65 = scmp.eq.s32.totalorder %s19, 0
      %p66 = por %p64, %p65
      %p67 = scmp.ne.s32.totalorder %s53, %s54
      %p68 = scmp.eq.s32.totalorder %s20, 1
      %p69 = por %p67, %p68
      %p71 = scmp.ne.s32.totalorder %s54, %s70
      %p72 = scmp.eq.s32.totalorder %s20, 0
      %p73 = por %p71, %p72
      %s75 = sadd.s32 %s74, 1
      %p78 = scmp.eq.s32.totalorder %s14, 1
      %p79 = scmp.ne.s32.totalorder %s74, %s76
      %p80 = scmp.eq.s32.totalorder %s14, 0
      %p81 = por %p79, %p80
      %p82 = scmp.ne.s32.totalorder %s74, %s76
      %p83 = scmp.eq.s32.totalorder %s19, 1
      %p84 = por %p82, %p83
      %p85 = scmp.ne.s32.totalorder %s76, %s77
      %p86 = scmp.eq.s32.totalorder %s19, 0
      %p87 = por %p85, %p86
      %p88 = scmp.ne.s32.totalorder %s76, %s77
      %p89 = scmp.eq.s32.totalorder %s20, 1
      %p90 = por %p88, %p89
      %p92 = scmp.ne.s32.totalorder %s77, %s91
      %p93 = scmp.eq.s32.totalorder %s20, 0
      %p94 = por %p92, %p93
      %s96 = sadd.s32 %s95, 1
      %p99 = scmp.eq.s32.totalorder %s14, 1
      %p100 = scmp.ne.s32.totalorder %s95, %s97
      %p101 = scmp.eq.s32.totalorder %s14, 0
      %p102 = por %p100, %p101
      %p103 = scmp.ne.s32.totalorder %s95, %s97
      %p104 = scmp.eq.s32.totalorder %s19, 1
      %p105 = por %p103, %p104
      %p106 = scmp.ne.s32.totalorder %s97, %s98
      %p107 = scmp.eq.s32.totalorder %s19, 0
      %p108 = por %p106, %p107
      %p109 = scmp.ne.s32.totalorder %s97, %s98
      %p110 = scmp.eq.s32.totalorder %s20, 1
      %p111 = por %p109, %p110
      %p113 = scmp.ne.s32.totalorder %s98, %s112
      %p114 = scmp.eq.s32.totalorder %s20, 0
      %p115 = por %p113, %p114
      %s117 = sadd.s32 %s116, 1
      %p120 = scmp.eq.s32.totalorder %s14, 1
      %p121 = scmp.ne.s32.totalorder %s116, %s118
      %p122 = scmp.eq.s32.totalorder %s14, 0
      %p123 = por %p121, %p122
      %p124 = scmp.ne.s32.totalorder %s116, %s118
      %p125 = scmp.eq.s32.totalorder %s19, 1
      %p126 = por %p124, %p125
      %p127 = scmp.ne.s32.totalorder %s118, %s119
      %p128 = scmp.eq.s32.totalorder %s19, 0
      %p129 = por %p127, %p128
      %p130 = scmp.ne.s32.totalorder %s118, %s119
      %p131 = scmp.eq.s32.totalorder %s20, 1
      %p132 = por %p130, %p131
      %p134 = scmp.ne.s32.totalorder %s119, %s133
      %p135 = scmp.eq.s32.totalorder %s20, 0
      %p136 = por %p134, %p135
      %s137 = ssub.s32 %s14, %s21
      %p138 = scmp.eq.s32.totalorder %s137, 0
      %s140 = sadd.s32 %s139, 1
      %s141 = scalar_select %p138, %s139, %s140
      %p144 = pneg %p138
      %p145 = scmp.eq.s32.totalorder %s14, 1
      %p146 = por %p144, %p145
      %p147 = scmp.ne.s32.totalorder %s139, %s142
      %p148 = scmp.eq.s32.totalorder %s14, 0
      %p149 = por %p147, %p148
      %p150 = scmp.ne.s32.totalorder %s139, %s142
      %p151 = scmp.eq.s32.totalorder %s19, 1
      %p152 = por %p150, %p151
      %p153 = scmp.ne.s32.totalorder %s142, %s143
      %p154 = scmp.eq.s32.totalorder %s19, 0
      %p155 = por %p153, %p154
      %p156 = scmp.ne.s32.totalorder %s142, %s143
      %p157 = scmp.eq.s32.totalorder %s20, 1
      %p158 = por %p156, %p157
      %p160 = scmp.ne.s32.totalorder %s143, %s159
      %p161 = scmp.eq.s32.totalorder %s20, 0
      %p162 = por %p160, %p161
      %p163 = scmp.le.s32.totalorder 1, %s14
      %p164 = scmp.lt.s32.totalorder %s14, 3
      %p165 = pnand %p163, %p164
      %p166 = pneg %p165
      // Predicated region
      $region9: #{stem_block.5} parent=5 // pred_check
        _
      $region10: #{stem_block.5} parent=5 // pred_check_branch
        %168 = sbr.rel (%p165) target = $region12
      $region11: #{stem_block.5} parent=5 // pred_region
        %s169 = ssub.s32 %s14, 1
        // Predicated region
        $region13: #{stem_block.5} parent=11 // pred_check
          %p170 = pneg %p87
        $region14: #{stem_block.5} parent=11 // pred_check_branch
          %172 = sbr.rel (%p170) target = $region16
        $region15: #{stem_block.5} parent=11 // pred_region
          _
        $region16: #{stem_block.5} parent=11 // pred_fallthru
          _
        // Predicated region
        $region17: #{stem_block.5} parent=11 // pred_check
          %p173 = pneg %p108
        $region18: #{stem_block.5} parent=11 // pred_check_branch
          %175 = sbr.rel (%p173) target = $region20
        $region19: #{stem_block.5} parent=11 // pred_region
          _
        $region20: #{stem_block.5} parent=11 // pred_fallthru
          _
        // Predicated region
        $region21: #{stem_block.5} parent=11 // pred_check
          %p176 = pneg %p129
        $region22: #{stem_block.5} parent=11 // pred_check_branch
          %178 = sbr.rel (%p176) target = $region24
        $region23: #{stem_block.5} parent=11 // pred_region
          _
        $region24: #{stem_block.5} parent=11 // pred_fallthru
          _
      $region12: #{stem_block.5} parent=5 // pred_fallthru
        _
      %p179 = scmp.lt.s32.totalorder %s14, 2
      // Predicated region
      $region25: #{stem_block.5} parent=5 // pred_check
        %p180 = pneg %p179
      $region26: #{stem_block.5} parent=5 // pred_check_branch
        %182 = sbr.rel (%p180) target = $region28
      $region27: #{stem_block.5} parent=5 // pred_region
        // Predicated region
        $region29: #{stem_block.5} parent=27 // pred_check
          %p183 = pneg %p34
        $region30: #{stem_block.5} parent=27 // pred_check_branch
          %185 = sbr.rel (%p183) target = $region32
        $region31: #{stem_block.5} parent=27 // pred_region
          %p186 = scmp.lt.s32.totalorder %s14, 1
          %s187 = scalar_select %p186, %s14, 1
          %s188 = smul.addr %s187, 8
          %s189 = smul.addr %s188, 2
          %s190 = scalar_lea.vmem %s0, %s189
        $region32: #{stem_block.5} parent=27 // pred_fallthru
          _
        // Predicated region
        $region33: #{stem_block.5} parent=27 // pred_check
          %p191 = pneg %p60
        $region34: #{stem_block.5} parent=27 // pred_check_branch
          %193 = sbr.rel (%p191) target = $region36
        $region35: #{stem_block.5} parent=27 // pred_region
          %p194 = scmp.lt.s32.totalorder %s14, 1
          %s195 = scalar_select %p194, %s14, 1
          %s196 = smul.addr %s195, 2
          %s197 = smul.addr %s196, 4
          %s198 = scalar_lea.vmem %s1, %s197
        $region36: #{stem_block.5} parent=27 // pred_fallthru
          _
      $region28: #{stem_block.5} parent=5 // pred_fallthru
        _
      %p199 = scmp.le.s32.totalorder 1, %s14
      %p200 = scmp.lt.s32.totalorder %s14, 3
      %p201 = pnand %p199, %p200
      %p202 = pneg %p201
      // Predicated region
      $region37: #{stem_block.5} parent=5 // pred_check
        _
      $region38: #{stem_block.5} parent=5 // pred_check_branch
        %204 = sbr.rel (%p201) target = $region40
      $region39: #{stem_block.5} parent=5 // pred_region
        %s205 = ssub.s32 %s14, 1
        %p206 = scmp.lt.s32.totalorder %s19, 1
        %s207 = scalar_select %p206, %s19, 1
        %s208 = smul.addr %s207, 8
        %s209 = smul.addr %s208, 2
        %s210 = scalar_lea.vmem %s0, %s209
        %p211 = pneg %p40
        %p212 = pneg %p37
        %p213 = scmp.lt.s32.totalorder %s19, 1
        %s214 = scalar_select %p213, %s19, 1
        %s215 = smul.addr %s214, 2
        %s216 = smul.addr %s215, 4
        %s217 = scalar_lea.vmem %s1, %s216
        %p218 = pneg %p66
        %p219 = pneg %p63
        %p220 = pneg %p87
        %p221 = pneg %p84
        %p222 = pneg %p108
        %p223 = pneg %p105
        %p224 = pneg %p129
        %p225 = pneg %p126
        %p226 = pneg %p155
        %p227 = pneg %p152
        %s228 = sand.u32 %s142, 1
        %s229 = scalar_lea.sflag [#allocation3], %s228
        %s230 = sand.u32 %s142, 1
        %s231 = smul.addr %s230, 16
        %s232 = scalar_lea.vmem [#allocation2], %s231
        %p233 = scmp.lt.s32.totalorder %s19, 1
        %s234 = scalar_select %p233, %s19, 1
        %s235 = smul.addr %s234, 8
        %s236 = smul.addr %s235, 2
        %s237 = scalar_lea.vmem %s0, %s236
        %p238 = scmp.lt.s32.totalorder %s19, 1
        %s239 = scalar_select %p238, %s19, 1
        %s240 = smul.addr %s239, 2
        %s241 = smul.addr %s240, 4
        %s242 = scalar_lea.vmem %s1, %s241
        %v244 = vld [vmem:[%s237] sm:$0x3]
        %v245 = vld [vmem:[%s237 + $0x2] sm:$0x3]
        %v246 = vld [vmem:[%s237 + $0x4] sm:$0x3]
        %v247 = vld [vmem:[%s237 + $0x6] sm:$0x3]
        %v248 = vld [vmem:[%s237 + $0x8] sm:$0x3]
        %v249 = vld [vmem:[%s237 + $0xa] sm:$0x3]
        %v250 = vld [vmem:[%s237 + $0xc] sm:$0x3]
        %v251 = vld [vmem:[%s237 + $0xe] sm:$0x3]
        %v252 = vunpack.c.l.bf16 %v244
        %v253 = vunpack.c.l.bf16 %v246
        %v254 = vunpack.c.l.bf16 %v248
        %v255 = vunpack.c.l.bf16 %v250
        %v256 = vunpack.c.l.bf16 %v245
        %v257 = vunpack.c.l.bf16 %v247
        %v258 = vunpack.c.l.bf16 %v249
        %v259 = vunpack.c.l.bf16 %v251
        %v260 = vmax.f32 %v252, %v256
        %v261 = vmax.f32 %v253, %v257
        %v262 = vmax.f32 %v254, %v258
        %v263 = vmax.f32 %v255, %v259
        %v264 = vpack.c.bf16 %v260, %v260
        %v265 = vpack.c.bf16 %v261, %v261
        %v266 = vpack.c.bf16 %v262, %v262
        %v267 = vpack.c.bf16 %v263, %v263
        %v268 = vunpack.c.l.bf16 %v264
        %v269 = vunpack.c.l.bf16 %v265
        %v270 = vunpack.c.l.bf16 %v266
        %v271 = vunpack.c.l.bf16 %v267
        %276 = vrot.lane.b32.xlu0 %v268, 96
        %v277 = vpop.permute.xlu0 %276
        %278 = vrot.lane.b32.xlu0 %v269, 96
        %v279 = vpop.permute.xlu0 %278
        %280 = vrot.lane.b32.xlu0 %v270, 96
        %v281 = vpop.permute.xlu0 %280
        %282 = vrot.lane.b32.xlu0 %v271, 96
        %v283 = vpop.permute.xlu0 %282
        %v288 = vmax.f32 %v268, %v277
        %v289 = vmax.f32 %v269, %v279
        %v290 = vmax.f32 %v270, %v281
        %v291 = vmax.f32 %v271, %v283
        %v292 = vpack.c.bf16 %v288, %v288
        %v293 = vpack.c.bf16 %v289, %v289
        %v294 = vpack.c.bf16 %v290, %v290
        %v295 = vpack.c.bf16 %v291, %v291
        %v296 = vld [vmem:[%s242] sm:$0xf]
        %v297 = vld [vmem:[%s242 + $0x4] sm:$0xf]
        %v298 = vld [vmem:[%s2] sm:$0xf]
        %v299 = vld [vmem:[%s2 + $0x4] sm:$0xf]
        %v300 = vld [vmem:[%s2 + $0x8] sm:$0xf]
        %v301 = vld [vmem:[%s2 + $0xc] sm:$0xf]
        %v302 = vld [vmem:[%s3] sm:$0xf]
        %v303 = vld [vmem:[%s3 + $0x4] sm:$0xf]
        %v304 = vld [vmem:[%s3 + $0x8] sm:$0xf]
        %v305 = vld [vmem:[%s3 + $0xc] sm:$0xf]
        %v308 = vunpack.c.l.b16 %v296
        %v309 = vunpack.c.l.b16 %v297
        %v310 = vpack.c.b16 %v309, %v308
        %v315 = vunpack.c.l.b16 %v302
        %v316 = vunpack.c.l.b16 %v303
        %v317 = vunpack.c.l.b16 %v304
        %v318 = vunpack.c.l.b16 %v305
        %v319 = vpack.c.b16 %v316, %v315
        %v320 = vpack.c.b16 %v318, %v317
        %vm323 = vcmask 261120
        %v325 = vsel %vm323, %v310, 0
        %327 = vmatpush.bf16.msra.mxu0 0
        %328 = vmatpush.bf16.msra.mxu0 0
        %329 = vmatpush.bf16.msra.mxu0 0
        %330 = vmatpush.bf16.msra.mxu0 0
        %331 = vmatpush.bf16.msra.mxu0 0
        %332 = vmatpush.bf16.msra.mxu0 0
        %333 = vmatpush.bf16.msra.mxu0 %v320
        %334 = vmatpush.bf16.msra.mxu0 %v319
        %335 = vmatmul.bf16.gmra.mxu0 %v325
        %v336 = vpop.f32.mrf.mxu0
        %v337 = vadd.f32 0.0, %v336
        %v338 = vpop.f32.mrf.mxu0
        %v339 = vadd.f32 0.0, %v338
        %340 = vdwg.mxu0
        %342 = vst [vmem:[#allocation1] ss:$4 sm:$0xff] %v292
        %s344 = scalar_lea.vmem [#allocation1], 1
        %345 = vst [vmem:[%s344] ss:$4 sm:$0xff] %v293
        %s347 = scalar_lea.vmem [#allocation1], 2
        %348 = vst [vmem:[%s347] ss:$4 sm:$0xff] %v294
        %s350 = scalar_lea.vmem [#allocation1], 3
        %351 = vst [vmem:[%s350] ss:$4 sm:$0xff] %v295
        %v352 = vld.sshfl [vmem:[#allocation1] sm:$0xff pattern:$0x73625140]
        %v357 = vunpack.c.l.b16 %v298
        %v358 = vunpack.c.l.b16 %v299
        %v359 = vunpack.c.l.b16 %v300
        %v360 = vunpack.c.l.b16 %v301
        %v361 = vpack.c.b16 %v358, %v357
        %v362 = vpack.c.b16 %v360, %v359
        %v365 = vsel %vm323, %v352, 0
        %367 = vmatpush.bf16.msra.mxu0 0
        %368 = vmatpush.bf16.msra.mxu0 0
        %369 = vmatpush.bf16.msra.mxu0 0
        %370 = vmatpush.bf16.msra.mxu0 0
        %371 = vmatpush.bf16.msra.mxu0 0
        %372 = vmatpush.bf16.msra.mxu0 0
        %373 = vmatpush.bf16.msra.mxu0 %v362
        %374 = vmatpush.bf16.msra.mxu0 %v361
        %375 = vmatmul.bf16.gmra.mxu0 %v365
        %v376 = vpop.f32.mrf.mxu0
        %v377 = vadd.f32 %v337, %v376
        %v378 = vpop.f32.mrf.mxu0
        %v379 = vadd.f32 %v339, %v378
        %380 = vdwg.mxu0
        %v381 = vld [vmem:[%s4] sm:$0x1]
        %v383 = vperm.slane %v381, 0
        %v385 = vadd.f32 %v377, %v383
        %v386 = vadd.f32 %v379, %v383
        %v387 = vmax.f32 %v385, 0.0
        %v388 = vmax.f32 %v386, 0.0
        %389 = vst.msk [vmem:[%s232] sm:$0xff] %vm323, %v387
        %390 = vst.msk [vmem:[%s232 + $0x8] sm:$0xff] %vm323, %v388
        %s391 = sand.u32 %s142, 1
        %s392 = scalar_lea.sflag [#allocation3], %s391
        %s393 = sand.u32 %s142, 1
        %s394 = smul.addr %s393, 16
        %s395 = scalar_lea.vmem [#allocation2], %s394
        // Predicated region
        $region41: #{stem_block.5} parent=39 // pred_check
          %p396 = pneg %p152
        $region42: #{stem_block.5} parent=39 // pred_check_branch
          %398 = sbr.rel (%p396) target = $region44
        $region43: #{stem_block.5} parent=39 // pred_region
          %400 = vsyncadd %s392, 0
          %s401 = smul.addr %s19, 2
          %s402 = smul.addr %s401, 8
          %s403 = scalar_lea.hbm %s5, %s402
          %s404 = sshll.u32 %s395, 4
          %s405 = int_to_ptr.vmem [resolvable:$true] %s404
          %s406 = sshll.u32 %s403, 4
          %s407 = int_to_ptr.hbm [resolvable:$true] %s406
          %412 = dma.vmem_to_hbm [thread:$0]  %s405, 256, %s407, %s392, 128, 128, 8
        $region44: #{stem_block.5} parent=39 // pred_fallthru
          _
      $region40: #{stem_block.5} parent=5 // pred_fallthru
        _
      %p413 = scmp.le.s32.totalorder 2, %s14
      // Predicated region
      $region45: #{stem_block.5} parent=5 // pred_check
        %p414 = pneg %p413
      $region46: #{stem_block.5} parent=5 // pred_check_branch
        %416 = sbr.rel (%p414) target = $region48
      $region47: #{stem_block.5} parent=5 // pred_region
        %s417 = ssub.s32 %s14, 2
        // Predicated region
        $region49: #{stem_block.5} parent=47 // pred_check
          %p418 = pneg %p158
        $region50: #{stem_block.5} parent=47 // pred_check_branch
          %420 = sbr.rel (%p418) target = $region52
        $region51: #{stem_block.5} parent=47 // pred_region
          %s421 = sand.u32 %s143, 1
          %s422 = scalar_lea.sflag [#allocation3], %s421
          %s423 = sand.u32 %s143, 1
          %s424 = smul.addr %s423, 16
          %s425 = scalar_lea.vmem [#allocation2], %s424
          %427 = dma.done %s422, 256
        $region52: #{stem_block.5} parent=47 // pred_fallthru
          _
      $region48: #{stem_block.5} parent=5 // pred_fallthru
        _
    $region6: #{stem_block.5} parent=1 // loop_footer
      %s18 = sadd.s32 1, %s14
    $region7: #{stem_block.5} parent=1 // loop_footer_branch
      %13 = sbr.rel target = $region3
    $region8: #{stem_block.5} parent=1 // loop_exit
      _
    %428 = vsyncpa [#allocation3], 1
    %s429 = scalar_lea.sflag [#allocation3], 1
    %430 = vsyncpa %s429, 1

// kernel: stem_block.4
$region0: #{stem_block.4}
  #allocation0 [shape = 'u32[]', space=smem, size = 0x4, offset = 0x4, fixed_abs, tag = 'smem constant byte address 0x4 - core index']
  #allocation1 [shape = 'u32[72,128]{1,0:T(1,128)}', space=vmem, size = 0x9000, scoped, tag = 'internal scratch']
  %s0 = inlined_call_operand.vmem [shape: bf16[2,5,2,5,32], index: 0, kind: input, shape index: {}]
  %s1 = inlined_call_operand.vmem [shape: bf16[3,32,32], index: 1, kind: input, shape index: {}]
  %s2 = inlined_call_operand.vmem [shape: bf16[3,16,32], index: 2, kind: input, shape index: {}]
  %s3 = inlined_call_operand.vmem [shape: f32[1,32], index: 3, kind: input, shape index: {}]
  %s4 = inlined_call_operand.vmem [shape: bf16[2,16,32], index: 4, kind: output, shape index: {}]
  %s5 = sld [smem:[#allocation0]]
  $region49: #{stem_block.4} parent=0
    _
  %s7 = ssub.s32 1, %s5
  %s8 = scalar_select 0, %s7, %s5
  loop: start=0, step=1, limit=4
  $region2: #{stem_block.4} parent=0 // loop_pre_header
    _
  $region3: #{stem_block.4} parent=0 // loop_header
    %s10 = sphi 0, %s14
    %p11 = scmp.ge.s32.totalorder %s10, 4
    %s20 = sphi 0, %s22
    %s23 = sphi 0, %s20
    %s24 = sphi 0, %s23
    %s40 = sphi 0, %s24
    %s44 = sphi 0, %s44
    %s46 = sphi 0, %s44
    %s47 = sphi 0, %s46
    %s61 = sphi 0, %s47
    %s65 = sphi 0, %s65
    %s67 = sphi 0, %s65
    %s68 = sphi 0, %s67
    %s82 = sphi 0, %s68
    %s86 = sphi 0, %s86
    %s88 = sphi 0, %s86
    %s89 = sphi 0, %s88
    %s103 = sphi 0, %s89
    %s109 = sphi 0, %s111
    %s112 = sphi 0, %s109
    %s113 = sphi 0, %s112
    %s129 = sphi 0, %s113
  $region4: #{stem_block.4} parent=0 // loop_header_branch
    %13 = sbr.rel (%p11) target = $region8
  $region5: #{stem_block.4} parent=0 // loop_body
    %s15 = ssub.s32 %s10, 1
    %s16 = ssub.s32 %s10, 2
    %s17 = sadd.s32 %s10, 1
    %s18 = ssub.s32 %s10, %s17
    %p19 = scmp.eq.s32.totalorder %s18, 0
    %s21 = sadd.s32 %s20, 1
    %s22 = scalar_select %p19, %s20, %s21
    %p25 = pneg %p19
    %p26 = scmp.eq.s32.totalorder %s10, 1
    %p27 = por %p25, %p26
    %p28 = scmp.ne.s32.totalorder %s20, %s23
    %p29 = scmp.eq.s32.totalorder %s10, 0
    %p30 = por %p28, %p29
    %p31 = scmp.ne.s32.totalorder %s20, %s23
    %p32 = scmp.eq.s32.totalorder %s15, 1
    %p33 = por %p31, %p32
    %p34 = scmp.ne.s32.totalorder %s23, %s24
    %p35 = scmp.eq.s32.totalorder %s15, 0
    %p36 = por %p34, %p35
    %p37 = scmp.ne.s32.totalorder %s23, %s24
    %p38 = scmp.eq.s32.totalorder %s16, 1
    %p39 = por %p37, %p38
    %p41 = scmp.ne.s32.totalorder %s24, %s40
    %p42 = scmp.eq.s32.totalorder %s16, 0
    %p43 = por %p41, %p42
    %s45 = sadd.s32 %s44, 1
    %p48 = scmp.eq.s32.totalorder %s10, 1
    %p49 = scmp.ne.s32.totalorder %s44, %s46
    %p50 = scmp.eq.s32.totalorder %s10, 0
    %p51 = por %p49, %p50
    %p52 = scmp.ne.s32.totalorder %s44, %s46
    %p53 = scmp.eq.s32.totalorder %s15, 1
    %p54 = por %p52, %p53
    %p55 = scmp.ne.s32.totalorder %s46, %s47
    %p56 = scmp.eq.s32.totalorder %s15, 0
    %p57 = por %p55, %p56
    %p58 = scmp.ne.s32.totalorder %s46, %s47
    %p59 = scmp.eq.s32.totalorder %s16, 1
    %p60 = por %p58, %p59
    %p62 = scmp.ne.s32.totalorder %s47, %s61
    %p63 = scmp.eq.s32.totalorder %s16, 0
    %p64 = por %p62, %p63
    %s66 = sadd.s32 %s65, 1
    %p69 = scmp.eq.s32.totalorder %s10, 1
    %p70 = scmp.ne.s32.totalorder %s65, %s67
    %p71 = scmp.eq.s32.totalorder %s10, 0
    %p72 = por %p70, %p71
    %p73 = scmp.ne.s32.totalorder %s65, %s67
    %p74 = scmp.eq.s32.totalorder %s15, 1
    %p75 = por %p73, %p74
    %p76 = scmp.ne.s32.totalorder %s67, %s68
    %p77 = scmp.eq.s32.totalorder %s15, 0
    %p78 = por %p76, %p77
    %p79 = scmp.ne.s32.totalorder %s67, %s68
    %p80 = scmp.eq.s32.totalorder %s16, 1
    %p81 = por %p79, %p80
    %p83 = scmp.ne.s32.totalorder %s68, %s82
    %p84 = scmp.eq.s32.totalorder %s16, 0
    %p85 = por %p83, %p84
    %s87 = sadd.s32 %s86, 1
    %p90 = scmp.eq.s32.totalorder %s10, 1
    %p91 = scmp.ne.s32.totalorder %s86, %s88
    %p92 = scmp.eq.s32.totalorder %s10, 0
    %p93 = por %p91, %p92
    %p94 = scmp.ne.s32.totalorder %s86, %s88
    %p95 = scmp.eq.s32.totalorder %s15, 1
    %p96 = por %p94, %p95
    %p97 = scmp.ne.s32.totalorder %s88, %s89
    %p98 = scmp.eq.s32.totalorder %s15, 0
    %p99 = por %p97, %p98
    %p100 = scmp.ne.s32.totalorder %s88, %s89
    %p101 = scmp.eq.s32.totalorder %s16, 1
    %p102 = por %p100, %p101
    %p104 = scmp.ne.s32.totalorder %s89, %s103
    %p105 = scmp.eq.s32.totalorder %s16, 0
    %p106 = por %p104, %p105
    %s107 = ssub.s32 %s10, %s17
    %p108 = scmp.eq.s32.totalorder %s107, 0
    %s110 = sadd.s32 %s109, 1
    %s111 = scalar_select %p108, %s109, %s110
    %p114 = pneg %p108
    %p115 = scmp.eq.s32.totalorder %s10, 1
    %p116 = por %p114, %p115
    %p117 = scmp.ne.s32.totalorder %s109, %s112
    %p118 = scmp.eq.s32.totalorder %s10, 0
    %p119 = por %p117, %p118
    %p120 = scmp.ne.s32.totalorder %s109, %s112
    %p121 = scmp.eq.s32.totalorder %s15, 1
    %p122 = por %p120, %p121
    %p123 = scmp.ne.s32.totalorder %s112, %s113
    %p124 = scmp.eq.s32.totalorder %s15, 0
    %p125 = por %p123, %p124
    %p126 = scmp.ne.s32.totalorder %s112, %s113
    %p127 = scmp.eq.s32.totalorder %s16, 1
    %p128 = por %p126, %p127
    %p130 = scmp.ne.s32.totalorder %s113, %s129
    %p131 = scmp.eq.s32.totalorder %s16, 0
    %p132 = por %p130, %p131
    %p133 = scmp.le.s32.totalorder 1, %s10
    %p134 = scmp.lt.s32.totalorder %s10, 3
    %p135 = pnand %p133, %p134
    %p136 = pneg %p135
    // Predicated region
    $region9: #{stem_block.4} parent=5 // pred_check
      _
    $region10: #{stem_block.4} parent=5 // pred_check_branch
      %138 = sbr.rel (%p135) target = $region12
    $region11: #{stem_block.4} parent=5 // pred_region
      %s139 = ssub.s32 %s10, 1
      // Predicated region
      $region13: #{stem_block.4} parent=11 // pred_check
        %p140 = pneg %p57
      $region14: #{stem_block.4} parent=11 // pred_check_branch
        %142 = sbr.rel (%p140) target = $region16
      $region15: #{stem_block.4} parent=11 // pred_region
        _
      $region16: #{stem_block.4} parent=11 // pred_fallthru
        _
      // Predicated region
      $region17: #{stem_block.4} parent=11 // pred_check
        %p143 = pneg %p78
      $region18: #{stem_block.4} parent=11 // pred_check_branch
        %145 = sbr.rel (%p143) target = $region20
      $region19: #{stem_block.4} parent=11 // pred_region
        _
      $region20: #{stem_block.4} parent=11 // pred_fallthru
        _
      // Predicated region
      $region21: #{stem_block.4} parent=11 // pred_check
        %p146 = pneg %p99
      $region22: #{stem_block.4} parent=11 // pred_check_branch
        %148 = sbr.rel (%p146) target = $region24
      $region23: #{stem_block.4} parent=11 // pred_region
        _
      $region24: #{stem_block.4} parent=11 // pred_fallthru
        _
    $region12: #{stem_block.4} parent=5 // pred_fallthru
      _
    %p149 = scmp.lt.s32.totalorder %s10, 2
    // Predicated region
    $region25: #{stem_block.4} parent=5 // pred_check
      %p150 = pneg %p149
    $region26: #{stem_block.4} parent=5 // pred_check_branch
      %152 = sbr.rel (%p150) target = $region28
    $region27: #{stem_block.4} parent=5 // pred_region
      // Predicated region
      $region29: #{stem_block.4} parent=27 // pred_check
        %p153 = pneg %p30
      $region30: #{stem_block.4} parent=27 // pred_check_branch
        %155 = sbr.rel (%p153) target = $region32
      $region31: #{stem_block.4} parent=27 // pred_region
        %p156 = scmp.lt.s32.totalorder %s10, 1
        %s157 = scalar_select %p156, %s10, 1
        %s158 = smul.addr %s157, 10
        %s159 = smul.addr %s158, 4
        %s160 = scalar_lea.vmem %s0, %s159
      $region32: #{stem_block.4} parent=27 // pred_fallthru
        _
    $region28: #{stem_block.4} parent=5 // pred_fallthru
      _
    %p161 = scmp.le.s32.totalorder 1, %s10
    %p162 = scmp.lt.s32.totalorder %s10, 3
    %p163 = pnand %p161, %p162
    %p164 = pneg %p163
    // Predicated region
    $region33: #{stem_block.4} parent=5 // pred_check
      _
    $region34: #{stem_block.4} parent=5 // pred_check_branch
      %166 = sbr.rel (%p163) target = $region36
    $region35: #{stem_block.4} parent=5 // pred_region
      %s167 = ssub.s32 %s10, 1
      %p168 = scmp.lt.s32.totalorder %s15, 1
      %s169 = scalar_select %p168, %s15, 1
      %s170 = smul.addr %s169, 10
      %s171 = smul.addr %s170, 4
      %s172 = scalar_lea.vmem %s0, %s171
      %p173 = pneg %p36
      %p174 = pneg %p33
      %p175 = pneg %p57
      %p176 = pneg %p54
      %p177 = pneg %p78
      %p178 = pneg %p75
      %p179 = pneg %p99
      %p180 = pneg %p96
      %p181 = pneg %p125
      %p182 = pneg %p122
      %p183 = scmp.lt.s32.totalorder %s15, 1
      %s184 = scalar_select %p183, %s15, 1
      %s185 = smul.addr %s184, 2
      %s186 = smul.addr %s185, 4
      %s187 = scalar_lea.vmem %s4, %s186
      %p188 = scmp.lt.s32.totalorder %s15, 1
      %s189 = scalar_select %p188, %s15, 1
      %s190 = smul.addr %s189, 10
      %s191 = smul.addr %s190, 4
      %s192 = scalar_lea.vmem %s0, %s191
      %p193 = scmp.lt.s32.totalorder %s15, 1
      %s194 = scalar_select %p193, %s15, 1
      %s195 = smul.addr %s194, 2
      %s196 = smul.addr %s195, 4
      %s197 = scalar_lea.vmem %s4, %s196
      %v199 = vld [vmem:[%s192] sm:$0x7]
      %v200 = vld [vmem:[%s192 + $0x4] sm:$0x7]
      %v201 = vld [vmem:[%s192 + $0x8] sm:$0x7]
      %v202 = vld [vmem:[%s192 + $0xc] sm:$0x7]
      %v203 = vld [vmem:[%s192 + $0x10] sm:$0x7]
      %v204 = vld [vmem:[%s192 + $0x14] sm:$0x7]
      %v205 = vld [vmem:[%s192 + $0x18] sm:$0x7]
      %v206 = vld [vmem:[%s192 + $0x1c] sm:$0x7]
      %v207 = vld [vmem:[%s192 + $0x20] sm:$0x7]
      %v212 = vrot.slane %v199, 2
      %v213 = vrot.slane %v201, 2
      %v214 = vrot.slane %v203, 2
      %v215 = vrot.slane %v205, 2
      %vm216 = vcmask 1041408
      %v219 = vsel %vm216, %v199, %v212
      %vm220 = vcmask 1043458
      %v221 = vsel %vm220, %v199, %v212
      %v223 = vrot.slane %v221, 2
      %v226 = vsel %vm216, %v201, %v213
      %v227 = vsel %vm220, %v201, %v213
      %v229 = vrot.slane %v227, 2
      %v232 = vsel %vm216, %v203, %v214
      %v233 = vsel %vm220, %v203, %v214
      %v235 = vrot.slane %v233, 2
      %v238 = vsel %vm216, %v205, %v215
      %v239 = vsel %vm220, %v205, %v215
      %v241 = vrot.slane %v239, 2
      %vm242 = vsmask.f32 1280
      %vm243 = vsmask.f32 3336
      %vm244 = vmor %vm242, %vm243
      %vm245 = vsmask.f32 5392
      %vm246 = vmor %vm244, %vm245
      %vm247 = vsmask.f32 7448
      %vm248 = vmor %vm246, %vm247
      %v249 = vshrl.u32 %v219, 16
      %v251 = vrot.slane %v249, 6
      %v252 = vshll.u32 %v219, 16
      %v254 = vrot.slane %v252, 7
      %v255 = vor.u32 %v251, %v254
      %v256 = vrot.slane %v255, 2
      %v258 = vshll.u32 %v223, 16
      %v260 = vrot.slane %v258, 7
      %v261 = vsel %vm248, %v256, %v260
      %v262 = vshrl.u32 %v226, 16
      %v264 = vrot.slane %v262, 6
      %v265 = vshll.u32 %v226, 16
      %v267 = vrot.slane %v265, 7
      %v268 = vor.u32 %v264, %v267
      %v269 = vrot.slane %v268, 2
      %v271 = vshll.u32 %v229, 16
      %v273 = vrot.slane %v271, 7
      %v274 = vsel %vm248, %v269, %v273
      %v275 = vshrl.u32 %v232, 16
      %v277 = vrot.slane %v275, 6
      %v278 = vshll.u32 %v232, 16
      %v280 = vrot.slane %v278, 7
      %v281 = vor.u32 %v277, %v280
      %v282 = vrot.slane %v281, 2
      %v284 = vshll.u32 %v235, 16
      %v286 = vrot.slane %v284, 7
      %v287 = vsel %vm248, %v282, %v286
      %v288 = vshrl.u32 %v238, 16
      %v290 = vrot.slane %v288, 6
      %v291 = vshll.u32 %v238, 16
      %v293 = vrot.slane %v291, 7
      %v294 = vor.u32 %v290, %v293
      %v295 = vrot.slane %v294, 2
      %v297 = vshll.u32 %v241, 16
      %v299 = vrot.slane %v297, 7
      %v300 = vsel %vm248, %v295, %v299
      %v301 = vld [vmem:[%s1] sm:$0xf]
      %v302 = vld [vmem:[%s1 + $0x4] sm:$0xf]
      %v303 = vld [vmem:[%s1 + $0x8] sm:$0xf]
      %v304 = vld [vmem:[%s1 + $0xc] sm:$0xf]
      %v305 = vld [vmem:[%s2] sm:$0xf]
      %v306 = vld [vmem:[%s2 + $0x4] sm:$0xf]
      %308 = vst [vmem:[#allocation1] ss:$4 sm:$0xff] %v261
      %s310 = scalar_lea.vmem [#allocation1], 1
      %311 = vst [vmem:[%s310] ss:$4 sm:$0xff] %v274
      %s313 = scalar_lea.vmem [#allocation1], 2
      %314 = vst [vmem:[%s313] ss:$4 sm:$0xff] %v287
      %s316 = scalar_lea.vmem [#allocation1], 3
      %317 = vst [vmem:[%s316] ss:$4 sm:$0xff] %v300
      %v318 = vld.sshfl [vmem:[#allocation1] sm:$0xff pattern:$0x73625140]
      %v321 = vunpack.c.l.b16 %v305
      %v322 = vunpack.c.l.b16 %v306
      %v323 = vpack.c.b16 %v322, %v321
      %vm325 = vcmask 130048
      %v326 = vsel %vm325, %v318, 0
      %328 = vmatpush.bf16.msra.mxu0 0
      %329 = vmatpush.bf16.msra.mxu0 0
      %330 = vmatpush.bf16.msra.mxu0 0
      %331 = vmatpush.bf16.msra.mxu0 0
      %332 = vmatpush.bf16.msra.mxu0 0
      %333 = vmatpush.bf16.msra.mxu0 0
      %334 = vmatpush.bf16.msra.mxu0 0
      %335 = vmatpush.bf16.msra.mxu0 %v323
      %336 = vmatmul.bf16.gmra.mxu0 %v326
      %v337 = vpop.f32.mrf.mxu0
      %v338 = vadd.f32 0.0, %v337
      %v339 = vpop.f32.mrf.mxu0
      %v340 = vadd.f32 0.0, %v339
      %341 = vdwg.mxu0
      %342 = vst [vmem:[#allocation1] ss:$4 sm:$0xff] %v199
      %s343 = scalar_lea.vmem [#allocation1], 1
      %344 = vst [vmem:[%s343] ss:$4 sm:$0xff] %v201
      %s345 = scalar_lea.vmem [#allocation1], 2
      %346 = vst [vmem:[%s345] ss:$4 sm:$0xff] %v203
      %s347 = scalar_lea.vmem [#allocation1], 3
      %348 = vst [vmem:[%s347] ss:$4 sm:$0xff] %v205
      %v349 = vld.sshfl [vmem:[#allocation1] sm:$0xff pattern:$0x73625140]
      %v354 = vunpack.c.l.b16 %v301
      %v355 = vunpack.c.l.b16 %v302
      %v356 = vunpack.c.l.b16 %v303
      %v357 = vunpack.c.l.b16 %v304
      %v358 = vpack.c.b16 %v355, %v354
      %v359 = vpack.c.b16 %v357, %v356
      %vm362 = vcmask 261120
      %v363 = vsel %vm362, %v349, 0
      %365 = vmatpush.bf16.msra.mxu0 0
      %366 = vmatpush.bf16.msra.mxu0 0
      %367 = vmatpush.bf16.msra.mxu0 0
      %368 = vmatpush.bf16.msra.mxu0 0
      %369 = vmatpush.bf16.msra.mxu0 0
      %370 = vmatpush.bf16.msra.mxu0 0
      %371 = vmatpush.bf16.msra.mxu0 %v359
      %372 = vmatpush.bf16.msra.mxu0 %v358
      %373 = vmatmul.bf16.gmra.mxu0 %v363
      %v374 = vpop.f32.mrf.mxu0
      %v375 = vadd.f32 %v338, %v374
      %v376 = vpop.f32.mrf.mxu0
      %v377 = vadd.f32 %v340, %v376
      %378 = vdwg.mxu0
      %v383 = vrot.slane %v200, 2
      %v384 = vrot.slane %v202, 2
      %v385 = vrot.slane %v204, 2
      %v386 = vrot.slane %v206, 2
      %v389 = vsel %vm216, %v200, %v383
      %v390 = vsel %vm220, %v200, %v383
      %v392 = vrot.slane %v390, 2
      %v395 = vsel %vm216, %v202, %v384
      %v396 = vsel %vm220, %v202, %v384
      %v398 = vrot.slane %v396, 2
      %v401 = vsel %vm216, %v204, %v385
      %v402 = vsel %vm220, %v204, %v385
      %v404 = vrot.slane %v402, 2
      %v407 = vsel %vm216, %v206, %v386
      %v408 = vsel %vm220, %v206, %v386
      %v410 = vrot.slane %v408, 2
      %v411 = vshrl.u32 %v389, 16
      %v413 = vrot.slane %v411, 6
      %v414 = vshll.u32 %v389, 16
      %v416 = vrot.slane %v414, 7
      %v417 = vor.u32 %v413, %v416
      %v418 = vrot.slane %v417, 2
      %v420 = vshll.u32 %v392, 16
      %v422 = vrot.slane %v420, 7
      %v423 = vsel %vm248, %v418, %v422
      %v424 = vshrl.u32 %v395, 16
      %v426 = vrot.slane %v424, 6
      %v427 = vshll.u32 %v395, 16
      %v429 = vrot.slane %v427, 7
      %v430 = vor.u32 %v426, %v429
      %v431 = vrot.slane %v430, 2
      %v433 = vshll.u32 %v398, 16
      %v435 = vrot.slane %v433, 7
      %v436 = vsel %vm248, %v431, %v435
      %v437 = vshrl.u32 %v401, 16
      %v439 = vrot.slane %v437, 6
      %v440 = vshll.u32 %v401, 16
      %v442 = vrot.slane %v440, 7
      %v443 = vor.u32 %v439, %v442
      %v444 = vrot.slane %v443, 2
      %v446 = vshll.u32 %v404, 16
      %v448 = vrot.slane %v446, 7
      %v449 = vsel %vm248, %v444, %v448
      %v450 = vshrl.u32 %v407, 16
      %v452 = vrot.slane %v450, 6
      %v453 = vshll.u32 %v407, 16
      %v455 = vrot.slane %v453, 7
      %v456 = vor.u32 %v452, %v455
      %v457 = vrot.slane %v456, 2
      %v459 = vshll.u32 %v410, 16
      %v461 = vrot.slane %v459, 7
      %v462 = vsel %vm248, %v457, %v461
      %s463 = scalar_lea.vmem %s1, 16
      %v464 = vld [vmem:[%s463] sm:$0xf]
      %v465 = vld [vmem:[%s463 + $0x4] sm:$0xf]
      %v466 = vld [vmem:[%s463 + $0x8] sm:$0xf]
      %v467 = vld [vmem:[%s463 + $0xc] sm:$0xf]
      %468 = vst [vmem:[#allocation1] ss:$4 sm:$0xff] %v200
      %s469 = scalar_lea.vmem [#allocation1], 1
      %470 = vst [vmem:[%s469] ss:$4 sm:$0xff] %v202
      %s471 = scalar_lea.vmem [#allocation1], 2
      %472 = vst [vmem:[%s471] ss:$4 sm:$0xff] %v204
      %s473 = scalar_lea.vmem [#allocation1], 3
      %474 = vst [vmem:[%s473] ss:$4 sm:$0xff] %v206
      %v475 = vld.sshfl [vmem:[#allocation1] sm:$0xff pattern:$0x73625140]
      %v480 = vunpack.c.l.b16 %v464
      %v481 = vunpack.c.l.b16 %v465
      %v482 = vunpack.c.l.b16 %v466
      %v483 = vunpack.c.l.b16 %v467
      %v484 = vpack.c.b16 %v481, %v480
      %v485 = vpack.c.b16 %v483, %v482
      %v488 = vsel %vm362, %v475, 0
      %490 = vmatpush.bf16.msra.mxu0 0
      %491 = vmatpush.bf16.msra.mxu0 0
      %492 = vmatpush.bf16.msra.mxu0 0
      %493 = vmatpush.bf16.msra.mxu0 0
      %494 = vmatpush.bf16.msra.mxu0 0
      %495 = vmatpush.bf16.msra.mxu0 0
      %496 = vmatpush.bf16.msra.mxu0 %v485
      %497 = vmatpush.bf16.msra.mxu0 %v484
      %498 = vmatmul.bf16.gmra.mxu0 %v488
      %v499 = vpop.f32.mrf.mxu0
      %v500 = vadd.f32 0.0, %v499
      %v501 = vpop.f32.mrf.mxu0
      %v502 = vadd.f32 0.0, %v501
      %503 = vdwg.mxu0
      %v504 = vadd.f32 %v375, %v500
      %v505 = vadd.f32 %v377, %v502
      %s506 = scalar_lea.vmem %s2, 8
      %v507 = vld [vmem:[%s506] sm:$0xf]
      %v508 = vld [vmem:[%s506 + $0x4] sm:$0xf]
      %510 = vst [vmem:[#allocation1] ss:$4 sm:$0xff] %v423
      %s512 = scalar_lea.vmem [#allocation1], 1
      %513 = vst [vmem:[%s512] ss:$4 sm:$0xff] %v436
      %s515 = scalar_lea.vmem [#allocation1], 2
      %516 = vst [vmem:[%s515] ss:$4 sm:$0xff] %v449
      %s518 = scalar_lea.vmem [#allocation1], 3
      %519 = vst [vmem:[%s518] ss:$4 sm:$0xff] %v462
      %v520 = vld.sshfl [vmem:[#allocation1] sm:$0xff pattern:$0x73625140]
      %v523 = vunpack.c.l.b16 %v507
      %v524 = vunpack.c.l.b16 %v508
      %v525 = vpack.c.b16 %v524, %v523
      %v527 = vsel %vm325, %v520, 0
      %529 = vmatpush.bf16.msra.mxu0 0
      %530 = vmatpush.bf16.msra.mxu0 0
      %531 = vmatpush.bf16.msra.mxu0 0
      %532 = vmatpush.bf16.msra.mxu0 0
      %533 = vmatpush.bf16.msra.mxu0 0
      %534 = vmatpush.bf16.msra.mxu0 0
      %535 = vmatpush.bf16.msra.mxu0 0
      %536 = vmatpush.bf16.msra.mxu0 %v525
      %537 = vmatmul.bf16.gmra.mxu0 %v527
      %v538 = vpop.f32.mrf.mxu0
      %v539 = vadd.f32 0.0, %v538
      %v540 = vpop.f32.mrf.mxu0
      %v541 = vadd.f32 0.0, %v540
      %542 = vdwg.mxu0
      %v543 = vadd.f32 %v504, %v539
      %v544 = vadd.f32 %v505, %v541
      %v546 = vrot.slane %v207, 2
      %v549 = vsel %vm216, %v207, %v546
      %v550 = vsel %vm220, %v207, %v546
      %v552 = vrot.slane %v550, 2
      %v553 = vshrl.u32 %v549, 16
      %v555 = vrot.slane %v553, 6
      %v556 = vshll.u32 %v549, 16
      %v558 = vrot.slane %v556, 7
      %v559 = vor.u32 %v555, %v558
      %v560 = vrot.slane %v559, 2
      %v562 = vshll.u32 %v552, 16
      %v564 = vrot.slane %v562, 7
      %v565 = vsel %vm248, %v560, %v564
      %s566 = scalar_lea.vmem %s1, 32
      %v567 = vld [vmem:[%s566] sm:$0xf]
      %v568 = vld [vmem:[%s566 + $0x4] sm:$0xf]
      %v569 = vld [vmem:[%s566 + $0x8] sm:$0xf]
      %v570 = vld [vmem:[%s566 + $0xc] sm:$0xf]
      %571 = vst [vmem:[#allocation1] ss:$4 sm:$0xff] %v201
      %s572 = scalar_lea.vmem [#allocation1], 1
      %573 = vst [vmem:[%s572] ss:$4 sm:$0xff] %v203
      %s574 = scalar_lea.vmem [#allocation1], 2
      %575 = vst [vmem:[%s574] ss:$4 sm:$0xff] %v205
      %s576 = scalar_lea.vmem [#allocation1], 3
      %577 = vst [vmem:[%s576] ss:$4 sm:$0xff] %v207
      %v578 = vld.sshfl [vmem:[#allocation1] sm:$0xff pattern:$0x73625140]
      %v583 = vunpack.c.l.b16 %v567
      %v584 = vunpack.c.l.b16 %v568
      %v585 = vunpack.c.l.b16 %v569
      %v586 = vunpack.c.l.b16 %v570
      %v587 = vpack.c.b16 %v584, %v583
      %v588 = vpack.c.b16 %v586, %v585
      %v591 = vsel %vm362, %v578, 0
      %593 = vmatpush.bf16.msra.mxu0 0
      %594 = vmatpush.bf16.msra.mxu0 0
      %595 = vmatpush.bf16.msra.mxu0 0
      %596 = vmatpush.bf16.msra.mxu0 0
      %597 = vmatpush.bf16.msra.mxu0 0
      %598 = vmatpush.bf16.msra.mxu0 0
      %599 = vmatpush.bf16.msra.mxu0 %v588
      %600 = vmatpush.bf16.msra.mxu0 %v587
      %601 = vmatmul.bf16.gmra.mxu0 %v591
      %v602 = vpop.f32.mrf.mxu0
      %v603 = vadd.f32 0.0, %v602
      %v604 = vpop.f32.mrf.mxu0
      %v605 = vadd.f32 0.0, %v604
      %606 = vdwg.mxu0
      %v607 = vadd.f32 %v543, %v603
      %v608 = vadd.f32 %v544, %v605
      %s609 = scalar_lea.vmem %s2, 16
      %v610 = vld [vmem:[%s609] sm:$0xf]
      %v611 = vld [vmem:[%s609 + $0x4] sm:$0xf]
      %612 = vst [vmem:[#allocation1] ss:$4 sm:$0xff] %v274
      %s613 = scalar_lea.vmem [#allocation1], 1
      %614 = vst [vmem:[%s613] ss:$4 sm:$0xff] %v287
      %s615 = scalar_lea.vmem [#allocation1], 2
      %616 = vst [vmem:[%s615] ss:$4 sm:$0xff] %v300
      %s618 = scalar_lea.vmem [#allocation1], 3
      %619 = vst [vmem:[%s618] ss:$4 sm:$0xff] %v565
      %v620 = vld.sshfl [vmem:[#allocation1] sm:$0xff pattern:$0x73625140]
      %v623 = vunpack.c.l.b16 %v610
      %v624 = vunpack.c.l.b16 %v611
      %v625 = vpack.c.b16 %v624, %v623
      %v627 = vsel %vm325, %v620, 0
      %629 = vmatpush.bf16.msra.mxu0 0
      %630 = vmatpush.bf16.msra.mxu0 0
      %631 = vmatpush.bf16.msra.mxu0 0
      %632 = vmatpush.bf16.msra.mxu0 0
      %633 = vmatpush.bf16.msra.mxu0 0
      %634 = vmatpush.bf16.msra.mxu0 0
      %635 = vmatpush.bf16.msra.mxu0 0
      %636 = vmatpush.bf16.msra.mxu0 %v625
      %637 = vmatmul.bf16.gmra.mxu0 %v627
      %v638 = vpop.f32.mrf.mxu0
      %v639 = vadd.f32 0.0, %v638
      %v640 = vpop.f32.mrf.mxu0
      %v641 = vadd.f32 0.0, %v640
      %642 = vdwg.mxu0
      %v643 = vadd.f32 %v607, %v639
      %v644 = vadd.f32 %v608, %v641
      %v645 = vld [vmem:[%s3] sm:$0x1]
      %v647 = vperm.slane %v645, 0
      %v649 = vadd.f32 %v643, %v647
      %v650 = vadd.f32 %v644, %v647
      %v651 = vmax.f32 %v649, 0.0
      %v652 = vmax.f32 %v650, 0.0
      %v653 = vpack.c.bf16 %v651, %v651
      %v654 = vpack.c.bf16 %v652, %v652
      %vm655 = vcmask 257024
      %656 = vst.msk [vmem:[%s197] sm:$0xf] %vm655, %v653
      %657 = vst.msk [vmem:[%s197 + $0x4] sm:$0xf] %vm655, %v654
      %p658 = scmp.lt.s32.totalorder %s15, 1
      %s659 = scalar_select %p658, %s15, 1
      %s660 = smul.addr %s659, 2
      %s661 = smul.addr %s660, 4
      %s662 = scalar_lea.vmem %s4, %s661
      // Predicated region
      $region37: #{stem_block.4} parent=35 // pred_check
        %p663 = pneg %p122
      $region38: #{stem_block.4} parent=35 // pred_check_branch
        %665 = sbr.rel (%p663) target = $region40
      $region39: #{stem_block.4} parent=35 // pred_region
        _
      $region40: #{stem_block.4} parent=35 // pred_fallthru
        _
    $region36: #{stem_block.4} parent=5 // pred_fallthru
      _
    %p666 = scmp.le.s32.totalorder 2, %s10
    // Predicated region
    $region41: #{stem_block.4} parent=5 // pred_check
      %p667 = pneg %p666
    $region42: #{stem_block.4} parent=5 // pred_check_branch
      %669 = sbr.rel (%p667) target = $region44
    $region43: #{stem_block.4} parent=5 // pred_region
      %s670 = ssub.s32 %s10, 2
      // Predicated region
      $region45: #{stem_block.4} parent=43 // pred_check
        %p671 = pneg %p128
      $region46: #{stem_block.4} parent=43 // pred_check_branch
        %673 = sbr.rel (%p671) target = $region48
      $region47: #{stem_block.4} parent=43 // pred_region
        %p674 = scmp.lt.s32.totalorder %s16, 1
        %s675 = scalar_select %p674, %s16, 1
        %s676 = smul.addr %s675, 2
        %s677 = smul.addr %s676, 4
        %s678 = scalar_lea.vmem %s4, %s677
      $region48: #{stem_block.4} parent=43 // pred_fallthru
        _
    $region44: #{stem_block.4} parent=5 // pred_fallthru
      _
  $region6: #{stem_block.4} parent=0 // loop_footer
    %s14 = sadd.s32 1, %s10
  $region7: #{stem_block.4} parent=0 // loop_footer_branch
    %9 = sbr.rel target = $region3
  $region8: #{stem_block.4} parent=0 // loop_exit
    _

// kernel: stem_block.3
$region0: #{stem_block.3}
  #allocation0 [shape = 'u32[]', space=smem, size = 0x4, offset = 0x4, fixed_abs, tag = 'smem constant byte address 0x4 - core index']
  #allocation1 [shape = 'u32[72,128]{1,0:T(1,128)}', space=vmem, size = 0x9000, scoped, tag = 'internal scratch']
  %s0 = inlined_call_operand.vmem [shape: bf16[2,9,2,9,8], index: 0, kind: input, shape index: {}]
  %s1 = inlined_call_operand.vmem [shape: bf16[3,8,32], index: 1, kind: input, shape index: {}]
  %s2 = inlined_call_operand.vmem [shape: bf16[3,4,32], index: 2, kind: input, shape index: {}]
  %s3 = inlined_call_operand.vmem [shape: f32[1,32], index: 3, kind: input, shape index: {}]
  %s4 = inlined_call_operand.vmem [shape: bf16[32,16], index: 4, kind: input, shape index: {}]
  %s5 = inlined_call_operand.vmem [shape: f32[1,16], index: 5, kind: input, shape index: {}]
  %s6 = inlined_call_operand.vmem [shape: bf16[2,64,32], index: 6, kind: output, shape index: {0}]
  %s7 = inlined_call_operand.vmem [shape: bf16[2,64,16], index: 7, kind: output, shape index: {1}]
  %8 = xla_tuple %s6, %s7
  %s9 = sld [smem:[#allocation0]]
  $region65: #{stem_block.3} parent=0
    _
  %s11 = ssub.s32 1, %s9
  %s12 = scalar_select 0, %s11, %s9
  loop: start=0, step=1, limit=4
  $region2: #{stem_block.3} parent=0 // loop_pre_header
    _
  $region3: #{stem_block.3} parent=0 // loop_header
    %s14 = sphi 0, %s18
    %p15 = scmp.ge.s32.totalorder %s14, 4
    %s24 = sphi 0, %s26
    %s27 = sphi 0, %s24
    %s28 = sphi 0, %s27
    %s44 = sphi 0, %s28
    %s48 = sphi 0, %s48
    %s50 = sphi 0, %s48
    %s51 = sphi 0, %s50
    %s65 = sphi 0, %s51
    %s69 = sphi 0, %s69
    %s71 = sphi 0, %s69
    %s72 = sphi 0, %s71
    %s86 = sphi 0, %s72
    %s90 = sphi 0, %s90
    %s92 = sphi 0, %s90
    %s93 = sphi 0, %s92
    %s107 = sphi 0, %s93
    %s111 = sphi 0, %s111
    %s113 = sphi 0, %s111
    %s114 = sphi 0, %s113
    %s128 = sphi 0, %s114
    %s132 = sphi 0, %s132
    %s134 = sphi 0, %s132
    %s135 = sphi 0, %s134
    %s149 = sphi 0, %s135
    %s155 = sphi 0, %s157
    %s158 = sphi 0, %s155
    %s159 = sphi 0, %s158
    %s175 = sphi 0, %s159
    %s181 = sphi 0, %s183
    %s184 = sphi 0, %s181
    %s185 = sphi 0, %s184
    %s201 = sphi 0, %s185
  $region4: #{stem_block.3} parent=0 // loop_header_branch
    %17 = sbr.rel (%p15) target = $region8
  $region5: #{stem_block.3} parent=0 // loop_body
    %s19 = ssub.s32 %s14, 1
    %s20 = ssub.s32 %s14, 2
    %s21 = sadd.s32 %s14, 1
    %s22 = ssub.s32 %s14, %s21
    %p23 = scmp.eq.s32.totalorder %s22, 0
    %s25 = sadd.s32 %s24, 1
    %s26 = scalar_select %p23, %s24, %s25
    %p29 = pneg %p23
    %p30 = scmp.eq.s32.totalorder %s14, 1
    %p31 = por %p29, %p30
    %p32 = scmp.ne.s32.totalorder %s24, %s27
    %p33 = scmp.eq.s32.totalorder %s14, 0
    %p34 = por %p32, %p33
    %p35 = scmp.ne.s32.totalorder %s24, %s27
    %p36 = scmp.eq.s32.totalorder %s19, 1
    %p37 = por %p35, %p36
    %p38 = scmp.ne.s32.totalorder %s27, %s28
    %p39 = scmp.eq.s32.totalorder %s19, 0
    %p40 = por %p38, %p39
    %p41 = scmp.ne.s32.totalorder %s27, %s28
    %p42 = scmp.eq.s32.totalorder %s20, 1
    %p43 = por %p41, %p42
    %p45 = scmp.ne.s32.totalorder %s28, %s44
    %p46 = scmp.eq.s32.totalorder %s20, 0
    %p47 = por %p45, %p46
    %s49 = sadd.s32 %s48, 1
    %p52 = scmp.eq.s32.totalorder %s14, 1
    %p53 = scmp.ne.s32.totalorder %s48, %s50
    %p54 = scmp.eq.s32.totalorder %s14, 0
    %p55 = por %p53, %p54
    %p56 = scmp.ne.s32.totalorder %s48, %s50
    %p57 = scmp.eq.s32.totalorder %s19, 1
    %p58 = por %p56, %p57
    %p59 = scmp.ne.s32.totalorder %s50, %s51
    %p60 = scmp.eq.s32.totalorder %s19, 0
    %p61 = por %p59, %p60
    %p62 = scmp.ne.s32.totalorder %s50, %s51
    %p63 = scmp.eq.s32.totalorder %s20, 1
    %p64 = por %p62, %p63
    %p66 = scmp.ne.s32.totalorder %s51, %s65
    %p67 = scmp.eq.s32.totalorder %s20, 0
    %p68 = por %p66, %p67
    %s70 = sadd.s32 %s69, 1
    %p73 = scmp.eq.s32.totalorder %s14, 1
    %p74 = scmp.ne.s32.totalorder %s69, %s71
    %p75 = scmp.eq.s32.totalorder %s14, 0
    %p76 = por %p74, %p75
    %p77 = scmp.ne.s32.totalorder %s69, %s71
    %p78 = scmp.eq.s32.totalorder %s19, 1
    %p79 = por %p77, %p78
    %p80 = scmp.ne.s32.totalorder %s71, %s72
    %p81 = scmp.eq.s32.totalorder %s19, 0
    %p82 = por %p80, %p81
    %p83 = scmp.ne.s32.totalorder %s71, %s72
    %p84 = scmp.eq.s32.totalorder %s20, 1
    %p85 = por %p83, %p84
    %p87 = scmp.ne.s32.totalorder %s72, %s86
    %p88 = scmp.eq.s32.totalorder %s20, 0
    %p89 = por %p87, %p88
    %s91 = sadd.s32 %s90, 1
    %p94 = scmp.eq.s32.totalorder %s14, 1
    %p95 = scmp.ne.s32.totalorder %s90, %s92
    %p96 = scmp.eq.s32.totalorder %s14, 0
    %p97 = por %p95, %p96
    %p98 = scmp.ne.s32.totalorder %s90, %s92
    %p99 = scmp.eq.s32.totalorder %s19, 1
    %p100 = por %p98, %p99
    %p101 = scmp.ne.s32.totalorder %s92, %s93
    %p102 = scmp.eq.s32.totalorder %s19, 0
    %p103 = por %p101, %p102
    %p104 = scmp.ne.s32.totalorder %s92, %s93
    %p105 = scmp.eq.s32.totalorder %s20, 1
    %p106 = por %p104, %p105
    %p108 = scmp.ne.s32.totalorder %s93, %s107
    %p109 = scmp.eq.s32.totalorder %s20, 0
    %p110 = por %p108, %p109
    %s112 = sadd.s32 %s111, 1
    %p115 = scmp.eq.s32.totalorder %s14, 1
    %p116 = scmp.ne.s32.totalorder %s111, %s113
    %p117 = scmp.eq.s32.totalorder %s14, 0
    %p118 = por %p116, %p117
    %p119 = scmp.ne.s32.totalorder %s111, %s113
    %p120 = scmp.eq.s32.totalorder %s19, 1
    %p121 = por %p119, %p120
    %p122 = scmp.ne.s32.totalorder %s113, %s114
    %p123 = scmp.eq.s32.totalorder %s19, 0
    %p124 = por %p122, %p123
    %p125 = scmp.ne.s32.totalorder %s113, %s114
    %p126 = scmp.eq.s32.totalorder %s20, 1
    %p127 = por %p125, %p126
    %p129 = scmp.ne.s32.totalorder %s114, %s128
    %p130 = scmp.eq.s32.totalorder %s20, 0
    %p131 = por %p129, %p130
    %s133 = sadd.s32 %s132, 1
    %p136 = scmp.eq.s32.totalorder %s14, 1
    %p137 = scmp.ne.s32.totalorder %s132, %s134
    %p138 = scmp.eq.s32.totalorder %s14, 0
    %p139 = por %p137, %p138
    %p140 = scmp.ne.s32.totalorder %s132, %s134
    %p141 = scmp.eq.s32.totalorder %s19, 1
    %p142 = por %p140, %p141
    %p143 = scmp.ne.s32.totalorder %s134, %s135
    %p144 = scmp.eq.s32.totalorder %s19, 0
    %p145 = por %p143, %p144
    %p146 = scmp.ne.s32.totalorder %s134, %s135
    %p147 = scmp.eq.s32.totalorder %s20, 1
    %p148 = por %p146, %p147
    %p150 = scmp.ne.s32.totalorder %s135, %s149
    %p151 = scmp.eq.s32.totalorder %s20, 0
    %p152 = por %p150, %p151
    %s153 = ssub.s32 %s14, %s21
    %p154 = scmp.eq.s32.totalorder %s153, 0
    %s156 = sadd.s32 %s155, 1
    %s157 = scalar_select %p154, %s155, %s156
    %p160 = pneg %p154
    %p161 = scmp.eq.s32.totalorder %s14, 1
    %p162 = por %p160, %p161
    %p163 = scmp.ne.s32.totalorder %s155, %s158
    %p164 = scmp.eq.s32.totalorder %s14, 0
    %p165 = por %p163, %p164
    %p166 = scmp.ne.s32.totalorder %s155, %s158
    %p167 = scmp.eq.s32.totalorder %s19, 1
    %p168 = por %p166, %p167
    %p169 = scmp.ne.s32.totalorder %s158, %s159
    %p170 = scmp.eq.s32.totalorder %s19, 0
    %p171 = por %p169, %p170
    %p172 = scmp.ne.s32.totalorder %s158, %s159
    %p173 = scmp.eq.s32.totalorder %s20, 1
    %p174 = por %p172, %p173
    %p176 = scmp.ne.s32.totalorder %s159, %s175
    %p177 = scmp.eq.s32.totalorder %s20, 0
    %p178 = por %p176, %p177
    %s179 = ssub.s32 %s14, %s21
    %p180 = scmp.eq.s32.totalorder %s179, 0
    %s182 = sadd.s32 %s181, 1
    %s183 = scalar_select %p180, %s181, %s182
    %p186 = pneg %p180
    %p187 = scmp.eq.s32.totalorder %s14, 1
    %p188 = por %p186, %p187
    %p189 = scmp.ne.s32.totalorder %s181, %s184
    %p190 = scmp.eq.s32.totalorder %s14, 0
    %p191 = por %p189, %p190
    %p192 = scmp.ne.s32.totalorder %s181, %s184
    %p193 = scmp.eq.s32.totalorder %s19, 1
    %p194 = por %p192, %p193
    %p195 = scmp.ne.s32.totalorder %s184, %s185
    %p196 = scmp.eq.s32.totalorder %s19, 0
    %p197 = por %p195, %p196
    %p198 = scmp.ne.s32.totalorder %s184, %s185
    %p199 = scmp.eq.s32.totalorder %s20, 1
    %p200 = por %p198, %p199
    %p202 = scmp.ne.s32.totalorder %s185, %s201
    %p203 = scmp.eq.s32.totalorder %s20, 0
    %p204 = por %p202, %p203
    %p205 = scmp.le.s32.totalorder 1, %s14
    %p206 = scmp.lt.s32.totalorder %s14, 3
    %p207 = pnand %p205, %p206
    %p208 = pneg %p207
    // Predicated region
    $region9: #{stem_block.3} parent=5 // pred_check
      _
    $region10: #{stem_block.3} parent=5 // pred_check_branch
      %210 = sbr.rel (%p207) target = $region12
    $region11: #{stem_block.3} parent=5 // pred_region
      %s211 = ssub.s32 %s14, 1
      // Predicated region
      $region13: #{stem_block.3} parent=11 // pred_check
        %p212 = pneg %p61
      $region14: #{stem_block.3} parent=11 // pred_check_branch
        %214 = sbr.rel (%p212) target = $region16
      $region15: #{stem_block.3} parent=11 // pred_region
        _
      $region16: #{stem_block.3} parent=11 // pred_fallthru
        _
      // Predicated region
      $region17: #{stem_block.3} parent=11 // pred_check
        %p215 = pneg %p82
      $region18: #{stem_block.3} parent=11 // pred_check_branch
        %217 = sbr.rel (%p215) target = $region20
      $region19: #{stem_block.3} parent=11 // pred_region
        _
      $region20: #{stem_block.3} parent=11 // pred_fallthru
        _
      // Predicated region
      $region21: #{stem_block.3} parent=11 // pred_check
        %p218 = pneg %p103
      $region22: #{stem_block.3} parent=11 // pred_check_branch
        %220 = sbr.rel (%p218) target = $region24
      $region23: #{stem_block.3} parent=11 // pred_region
        _
      $region24: #{stem_block.3} parent=11 // pred_fallthru
        _
      // Predicated region
      $region25: #{stem_block.3} parent=11 // pred_check
        %p221 = pneg %p124
      $region26: #{stem_block.3} parent=11 // pred_check_branch
        %223 = sbr.rel (%p221) target = $region28
      $region27: #{stem_block.3} parent=11 // pred_region
        _
      $region28: #{stem_block.3} parent=11 // pred_fallthru
        _
      // Predicated region
      $region29: #{stem_block.3} parent=11 // pred_check
        %p224 = pneg %p145
      $region30: #{stem_block.3} parent=11 // pred_check_branch
        %226 = sbr.rel (%p224) target = $region32
      $region31: #{stem_block.3} parent=11 // pred_region
        _
      $region32: #{stem_block.3} parent=11 // pred_fallthru
        _
    $region12: #{stem_block.3} parent=5 // pred_fallthru
      _
    %p227 = scmp.lt.s32.totalorder %s14, 2
    // Predicated region
    $region33: #{stem_block.3} parent=5 // pred_check
      %p228 = pneg %p227
    $region34: #{stem_block.3} parent=5 // pred_check_branch
      %230 = sbr.rel (%p228) target = $region36
    $region35: #{stem_block.3} parent=5 // pred_region
      // Predicated region
      $region37: #{stem_block.3} parent=35 // pred_check
        %p231 = pneg %p34
      $region38: #{stem_block.3} parent=35 // pred_check_branch
        %233 = sbr.rel (%p231) target = $region40
      $region39: #{stem_block.3} parent=35 // pred_region
        %p234 = scmp.lt.s32.totalorder %s14, 1
        %s235 = scalar_select %p234, %s14, 1
        %s236 = smul.addr %s235, 36
        %s237 = smul.addr %s236, 4
        %s238 = scalar_lea.vmem %s0, %s237
      $region40: #{stem_block.3} parent=35 // pred_fallthru
        _
    $region36: #{stem_block.3} parent=5 // pred_fallthru
      _
    %p239 = scmp.le.s32.totalorder 1, %s14
    %p240 = scmp.lt.s32.totalorder %s14, 3
    %p241 = pnand %p239, %p240
    %p242 = pneg %p241
    // Predicated region
    $region41: #{stem_block.3} parent=5 // pred_check
      _
    $region42: #{stem_block.3} parent=5 // pred_check_branch
      %244 = sbr.rel (%p241) target = $region44
    $region43: #{stem_block.3} parent=5 // pred_region
      %s245 = ssub.s32 %s14, 1
      %p246 = scmp.lt.s32.totalorder %s19, 1
      %s247 = scalar_select %p246, %s19, 1
      %s248 = smul.addr %s247, 36
      %s249 = smul.addr %s248, 4
      %s250 = scalar_lea.vmem %s0, %s249
      %p251 = pneg %p40
      %p252 = pneg %p37
      %p253 = pneg %p61
      %p254 = pneg %p58
      %p255 = pneg %p82
      %p256 = pneg %p79
      %p257 = pneg %p103
      %p258 = pneg %p100
      %p259 = pneg %p124
      %p260 = pneg %p121
      %p261 = pneg %p145
      %p262 = pneg %p142
      %p263 = pneg %p171
      %p264 = pneg %p168
      %p265 = scmp.lt.s32.totalorder %s19, 1
      %s266 = scalar_select %p265, %s19, 1
      %s267 = smul.addr %s266, 8
      %s268 = smul.addr %s267, 4
      %s269 = scalar_lea.vmem %s6, %s268
      %p270 = pneg %p197
      %p271 = pneg %p194
      %p272 = scmp.lt.s32.totalorder %s19, 1
      %s273 = scalar_select %p272, %s19, 1
      %s274 = smul.addr %s273, 8
      %s275 = smul.addr %s274, 4
      %s276 = scalar_lea.vmem %s7, %s275
      %p277 = scmp.lt.s32.totalorder %s19, 1
      %s278 = scalar_select %p277, %s19, 1
      %s279 = smul.addr %s278, 36
      %s280 = smul.addr %s279, 4
      %s281 = scalar_lea.vmem %s0, %s280
      %p282 = scmp.lt.s32.totalorder %s19, 1
      %s283 = scalar_select %p282, %s19, 1
      %s284 = smul.addr %s283, 8
      %s285 = smul.addr %s284, 4
      %s286 = scalar_lea.vmem %s6, %s285
      %p287 = scmp.lt.s32.totalorder %s19, 1
      %s288 = scalar_select %p287, %s19, 1
      %s289 = smul.addr %s288, 8
      %s290 = smul.addr %s289, 4
      %s291 = scalar_lea.vmem %s7, %s290
      %v293 = vld [vmem:[%s281] sm:$0xf]
      %v294 = vld [vmem:[%s281 + $0x4] sm:$0x1]
      %v295 = vld [vmem:[%s281 + $0x8] sm:$0xf]
      %v296 = vld [vmem:[%s281 + $0xc] sm:$0x1]
      %v297 = vld [vmem:[%s281 + $0x10] sm:$0xf]
      %v298 = vld [vmem:[%s281 + $0x14] sm:$0x1]
      %v299 = vld [vmem:[%s281 + $0x18] sm:$0xf]
      %v300 = vld [vmem:[%s281 + $0x1c] sm:$0x1]
      %v301 = vld [vmem:[%s281 + $0x20] sm:$0xf]
      %v302 = vld [vmem:[%s281 + $0x24] sm:$0x1]
      %v303 = vld [vmem:[%s281 + $0x28] sm:$0xf]
      %v304 = vld [vmem:[%s281 + $0x2c] sm:$0x1]
      %v305 = vld [vmem:[%s281 + $0x30] sm:$0xf]
      %v306 = vld [vmem:[%s281 + $0x34] sm:$0x1]
      %v307 = vld [vmem:[%s281 + $0x38] sm:$0xf]
      %v308 = vld [vmem:[%s281 + $0x3c] sm:$0x1]
      %v309 = vld [vmem:[%s281 + $0x40] sm:$0xf]
      %v310 = vld [vmem:[%s281 + $0x44] sm:$0x1]
      %v311 = vld [vmem:[%s281 + $0x48] sm:$0xf]
      %v312 = vld [vmem:[%s281 + $0x4c] sm:$0x1]
      %v313 = vld [vmem:[%s281 + $0x50] sm:$0xf]
      %v314 = vld [vmem:[%s281 + $0x54] sm:$0x1]
      %v315 = vld [vmem:[%s281 + $0x58] sm:$0xf]
      %v316 = vld [vmem:[%s281 + $0x5c] sm:$0x1]
      %v317 = vld [vmem:[%s281 + $0x60] sm:$0xf]
      %v318 = vld [vmem:[%s281 + $0x64] sm:$0x1]
      %v319 = vld [vmem:[%s281 + $0x68] sm:$0xf]
      %v320 = vld [vmem:[%s281 + $0x6c] sm:$0x1]
      %v321 = vld [vmem:[%s281 + $0x70] sm:$0xf]
      %v322 = vld [vmem:[%s281 + $0x74] sm:$0x1]
      %v323 = vld [vmem:[%s281 + $0x78] sm:$0xf]
      %v324 = vld [vmem:[%s281 + $0x7c] sm:$0x1]
      %v325 = vld [vmem:[%s281 + $0x80] sm:$0xf]
      %v326 = vld [vmem:[%s281 + $0x84] sm:$0x1]
      %vm327 = vsmask.f32 3328
      %vm328 = vsmask.f32 7440
      %vm329 = vmor %vm327, %vm328
      %v331 = vshrl.u32 %v293, 16
      %v333 = vrot.slane %v331, 4
      %v334 = vshll.u32 %v293, 16
      %v336 = vrot.slane %v334, 5
      %v337 = vor.u32 %v333, %v336
      %v338 = vrot.slane %v337, 4
      %v340 = vshll.u32 %v294, 16
      %v342 = vrot.slane %v340, 5
      %v343 = vsel %vm329, %v338, %v342
      %v345 = vshrl.u32 %v297, 16
      %v347 = vrot.slane %v345, 4
      %v348 = vshll.u32 %v297, 16
      %v350 = vrot.slane %v348, 5
      %v351 = vor.u32 %v347, %v350
      %v352 = vrot.slane %v351, 4
      %v354 = vshll.u32 %v298, 16
      %v356 = vrot.slane %v354, 5
      %v357 = vsel %vm329, %v352, %v356
      %v359 = vshrl.u32 %v301, 16
      %v361 = vrot.slane %v359, 4
      %v362 = vshll.u32 %v301, 16
      %v364 = vrot.slane %v362, 5
      %v365 = vor.u32 %v361, %v364
      %v366 = vrot.slane %v365, 4
      %v368 = vshll.u32 %v302, 16
      %v370 = vrot.slane %v368, 5
      %v371 = vsel %vm329, %v366, %v370
      %v373 = vshrl.u32 %v305, 16
      %v375 = vrot.slane %v373, 4
      %v376 = vshll.u32 %v305, 16
      %v378 = vrot.slane %v376, 5
      %v379 = vor.u32 %v375, %v378
      %v380 = vrot.slane %v379, 4
      %v382 = vshll.u32 %v306, 16
      %v384 = vrot.slane %v382, 5
      %v385 = vsel %vm329, %v380, %v384
      %v387 = vshrl.u32 %v309, 16
      %v389 = vrot.slane %v387, 4
      %v390 = vshll.u32 %v309, 16
      %v392 = vrot.slane %v390, 5
      %v393 = vor.u32 %v389, %v392
      %v394 = vrot.slane %v393, 4
      %v396 = vshll.u32 %v310, 16
      %v398 = vrot.slane %v396, 5
      %v399 = vsel %vm329, %v394, %v398
      %v401 = vshrl.u32 %v313, 16
      %v403 = vrot.slane %v401, 4
      %v404 = vshll.u32 %v313, 16
      %v406 = vrot.slane %v404, 5
      %v407 = vor.u32 %v403, %v406
      %v408 = vrot.slane %v407, 4
      %v410 = vshll.u32 %v314, 16
      %v412 = vrot.slane %v410, 5
      %v413 = vsel %vm329, %v408, %v412
      %v415 = vshrl.u32 %v317, 16
      %v417 = vrot.slane %v415, 4
      %v418 = vshll.u32 %v317, 16
      %v420 = vrot.slane %v418, 5
      %v421 = vor.u32 %v417, %v420
      %v422 = vrot.slane %v421, 4
      %v424 = vshll.u32 %v318, 16
      %v426 = vrot.slane %v424, 5
      %v427 = vsel %vm329, %v422, %v426
      %v429 = vshrl.u32 %v321, 16
      %v431 = vrot.slane %v429, 4
      %v432 = vshll.u32 %v321, 16
      %v434 = vrot.slane %v432, 5
      %v435 = vor.u32 %v431, %v434
      %v436 = vrot.slane %v435, 4
      %v438 = vshll.u32 %v322, 16
      %v440 = vrot.slane %v438, 5
      %v441 = vsel %vm329, %v436, %v440
      %v442 = vld [vmem:[%s1] sm:$0xf]
      %v443 = vld [vmem:[%s2] sm:$0x3]
      %v444 = vunpack.c.l.b16 %v343
      %v445 = vunpack.c.l.b16 %v357
      %v446 = vunpack.c.l.b16 %v371
      %v447 = vunpack.c.l.b16 %v385
      %v448 = vunpack.c.l.b16 %v399
      %v449 = vunpack.c.l.b16 %v413
      %v450 = vunpack.c.l.b16 %v427
      %v451 = vunpack.c.l.b16 %v441
      %v452 = vpack.c.b16 %v445, %v444
      %v453 = vpack.c.b16 %v447, %v446
      %v454 = vpack.c.b16 %v449, %v448
      %v455 = vpack.c.b16 %v451, %v450
      %vm456 = vcmask 31744
      %v458 = vsel %vm456, %v452, 0
      %v461 = vsel %vm456, %v453, 0
      %v464 = vsel %vm456, %v454, 0
      %v467 = vsel %vm456, %v455, 0
      %vm469 = vcmask 1041408
      %v471 = vsel %vm469, %v443, 0
      %473 = vmatpush.bf16.msra.mxu0 0
      %474 = vmatpush.bf16.msra.mxu0 0
      %475 = vmatpush.bf16.msra.mxu0 0
      %476 = vmatpush.bf16.msra.mxu0 0
      %477 = vmatpush.bf16.msra.mxu0 0
      %478 = vmatpush.bf16.msra.mxu0 0
      %479 = vmatpush.bf16.msra.mxu0 0
      %480 = vmatpush.bf16.msra.mxu0 %v471
      %481 = vmatmul.bf16.gmra.mxu0 %v458
      %v482 = vpop.f32.mrf.mxu0
      %v483 = vadd.f32 0.0, %v482
      %v484 = vpop.f32.mrf.mxu0
      %v485 = vadd.f32 0.0, %v484
      %486 = vmatmul.bf16.gmra.mxu0 %v461
      %v487 = vpop.f32.mrf.mxu0
      %v488 = vadd.f32 0.0, %v487
      %v489 = vpop.f32.mrf.mxu0
      %v490 = vadd.f32 0.0, %v489
      %491 = vmatmul.bf16.gmra.mxu0 %v464
      %v492 = vpop.f32.mrf.mxu0
      %v493 = vadd.f32 0.0, %v492
      %v494 = vpop.f32.mrf.mxu0
      %v495 = vadd.f32 0.0, %v494
      %496 = vmatmul.bf16.gmra.mxu0 %v467
      %v497 = vpop.f32.mrf.mxu0
      %v498 = vadd.f32 0.0, %v497
      %v499 = vpop.f32.mrf.mxu0
      %v500 = vadd.f32 0.0, %v499
      %501 = vdwg.mxu0
      %v510 = vunpack.c.l.b16 %v293
      %v511 = vunpack.c.l.b16 %v297
      %v512 = vunpack.c.l.b16 %v301
      %v513 = vunpack.c.l.b16 %v305
      %v514 = vunpack.c.l.b16 %v309
      %v515 = vunpack.c.l.b16 %v313
      %v516 = vunpack.c.l.b16 %v317
      %v517 = vunpack.c.l.b16 %v321
      %v518 = vpack.c.b16 %v511, %v510
      %v519 = vpack.c.b16 %v513, %v512
      %v520 = vpack.c.b16 %v515, %v514
      %v521 = vpack.c.b16 %v517, %v516
      %vm522 = vcmask 64512
      %v524 = vsel %vm522, %v518, 0
      %v527 = vsel %vm522, %v519, 0
      %v530 = vsel %vm522, %v520, 0
      %v533 = vsel %vm522, %v521, 0
      %vm535 = vcmask 1043456
      %v537 = vsel %vm535, %v442, 0
      %539 = vmatpush.bf16.msra.mxu0 0
      %540 = vmatpush.bf16.msra.mxu0 0
      %541 = vmatpush.bf16.msra.mxu0 0
      %542 = vmatpush.bf16.msra.mxu0 0
      %543 = vmatpush.bf16.msra.mxu0 0
      %544 = vmatpush.bf16.msra.mxu0 0
      %545 = vmatpush.bf16.msra.mxu0 0
      %546 = vmatpush.bf16.msra.mxu0 %v537
      %547 = vmatmul.bf16.gmra.mxu0 %v524
      %v548 = vpop.f32.mrf.mxu0
      %v549 = vadd.f32 %v483, %v548
      %v550 = vpop.f32.mrf.mxu0
      %v551 = vadd.f32 %v485, %v550
      %552 = vmatmul.bf16.gmra.mxu0 %v527
      %v553 = vpop.f32.mrf.mxu0
      %v554 = vadd.f32 %v488, %v553
      %v555 = vpop.f32.mrf.mxu0
      %v556 = vadd.f32 %v490, %v555
      %557 = vmatmul.bf16.gmra.mxu0 %v530
      %v558 = vpop.f32.mrf.mxu0
      %v559 = vadd.f32 %v493, %v558
      %v560 = vpop.f32.mrf.mxu0
      %v561 = vadd.f32 %v495, %v560
      %562 = vmatmul.bf16.gmra.mxu0 %v533
      %v563 = vpop.f32.mrf.mxu0
      %v564 = vadd.f32 %v498, %v563
      %v565 = vpop.f32.mrf.mxu0
      %v566 = vadd.f32 %v500, %v565
      %567 = vdwg.mxu0
      %v569 = vshrl.u32 %v295, 16
      %v571 = vrot.slane %v569, 4
      %v572 = vshll.u32 %v295, 16
      %v574 = vrot.slane %v572, 5
      %v575 = vor.u32 %v571, %v574
      %v576 = vrot.slane %v575, 4
      %v578 = vshll.u32 %v296, 16
      %v580 = vrot.slane %v578, 5
      %v581 = vsel %vm329, %v576, %v580
      %v583 = vshrl.u32 %v299, 16
      %v585 = vrot.slane %v583, 4
      %v586 = vshll.u32 %v299, 16
      %v588 = vrot.slane %v586, 5
      %v589 = vor.u32 %v585, %v588
      %v590 = vrot.slane %v589, 4
      %v592 = vshll.u32 %v300, 16
      %v594 = vrot.slane %v592, 5
      %v595 = vsel %vm329, %v590, %v594
      %v597 = vshrl.u32 %v303, 16
      %v599 = vrot.slane %v597, 4
      %v600 = vshll.u32 %v303, 16
      %v602 = vrot.slane %v600, 5
      %v603 = vor.u32 %v599, %v602
      %v604 = vrot.slane %v603, 4
      %v606 = vshll.u32 %v304, 16
      %v608 = vrot.slane %v606, 5
      %v609 = vsel %vm329, %v604, %v608
      %v611 = vshrl.u32 %v307, 16
      %v613 = vrot.slane %v611, 4
      %v614 = vshll.u32 %v307, 16
      %v616 = vrot.slane %v614, 5
      %v617 = vor.u32 %v613, %v616
      %v618 = vrot.slane %v617, 4
      %v620 = vshll.u32 %v308, 16
      %v622 = vrot.slane %v620, 5
      %v623 = vsel %vm329, %v618, %v622
      %v625 = vshrl.u32 %v311, 16
      %v627 = vrot.slane %v625, 4
      %v628 = vshll.u32 %v311, 16
      %v630 = vrot.slane %v628, 5
      %v631 = vor.u32 %v627, %v630
      %v632 = vrot.slane %v631, 4
      %v634 = vshll.u32 %v312, 16
      %v636 = vrot.slane %v634, 5
      %v637 = vsel %vm329, %v632, %v636
      %v639 = vshrl.u32 %v315, 16
      %v641 = vrot.slane %v639, 4
      %v642 = vshll.u32 %v315, 16
      %v644 = vrot.slane %v642, 5
      %v645 = vor.u32 %v641, %v644
      %v646 = vrot.slane %v645, 4
      %v648 = vshll.u32 %v316, 16
      %v650 = vrot.slane %v648, 5
      %v651 = vsel %vm329, %v646, %v650
      %v653 = vshrl.u32 %v319, 16
      %v655 = vrot.slane %v653, 4
      %v656 = vshll.u32 %v319, 16
      %v658 = vrot.slane %v656, 5
      %v659 = vor.u32 %v655, %v658
      %v660 = vrot.slane %v659, 4
      %v662 = vshll.u32 %v320, 16
      %v664 = vrot.slane %v662, 5
      %v665 = vsel %vm329, %v660, %v664
      %v667 = vshrl.u32 %v323, 16
      %v669 = vrot.slane %v667, 4
      %v670 = vshll.u32 %v323, 16
      %v672 = vrot.slane %v670, 5
      %v673 = vor.u32 %v669, %v672
      %v674 = vrot.slane %v673, 4
      %v676 = vshll.u32 %v324, 16
      %v678 = vrot.slane %v676, 5
      %v679 = vsel %vm329, %v674, %v678
      %s680 = scalar_lea.vmem %s1, 4
      %v681 = vld [vmem:[%s680] sm:$0xf]
      %v690 = vunpack.c.l.b16 %v295
      %v691 = vunpack.c.l.b16 %v299
      %v692 = vunpack.c.l.b16 %v303
      %v693 = vunpack.c.l.b16 %v307
      %v694 = vunpack.c.l.b16 %v311
      %v695 = vunpack.c.l.b16 %v315
      %v696 = vunpack.c.l.b16 %v319
      %v697 = vunpack.c.l.b16 %v323
      %v698 = vpack.c.b16 %v691, %v690
      %v699 = vpack.c.b16 %v693, %v692
      %v700 = vpack.c.b16 %v695, %v694
      %v701 = vpack.c.b16 %v697, %v696
      %v703 = vsel %vm522, %v698, 0
      %v706 = vsel %vm522, %v699, 0
      %v709 = vsel %vm522, %v700, 0
      %v712 = vsel %vm522, %v701, 0
      %v715 = vsel %vm535, %v681, 0
      %717 = vmatpush.bf16.msra.mxu0 0
      %718 = vmatpush.bf16.msra.mxu0 0
      %719 = vmatpush.bf16.msra.mxu0 0
      %720 = vmatpush.bf16.msra.mxu0 0
      %721 = vmatpush.bf16.msra.mxu0 0
      %722 = vmatpush.bf16.msra.mxu0 0
      %723 = vmatpush.bf16.msra.mxu0 0
      %724 = vmatpush.bf16.msra.mxu0 %v715
      %725 = vmatmul.bf16.gmra.mxu0 %v703
      %v726 = vpop.f32.mrf.mxu0
      %v727 = vadd.f32 0.0, %v726
      %v728 = vpop.f32.mrf.mxu0
      %v729 = vadd.f32 0.0, %v728
      %730 = vmatmul.bf16.gmra.mxu0 %v706
      %v731 = vpop.f32.mrf.mxu0
      %v732 = vadd.f32 0.0, %v731
      %v733 = vpop.f32.mrf.mxu0
      %v734 = vadd.f32 0.0, %v733
      %735 = vmatmul.bf16.gmra.mxu0 %v709
      %v736 = vpop.f32.mrf.mxu0
      %v737 = vadd.f32 0.0, %v736
      %v738 = vpop.f32.mrf.mxu0
      %v739 = vadd.f32 0.0, %v738
      %740 = vmatmul.bf16.gmra.mxu0 %v712
      %v741 = vpop.f32.mrf.mxu0
      %v742 = vadd.f32 0.0, %v741
      %v743 = vpop.f32.mrf.mxu0
      %v744 = vadd.f32 0.0, %v743
      %745 = vdwg.mxu0
      %v746 = vadd.f32 %v549, %v727
      %v747 = vadd.f32 %v551, %v729
      %v748 = vadd.f32 %v554, %v732
      %v749 = vadd.f32 %v556, %v734
      %v750 = vadd.f32 %v559, %v737
      %v751 = vadd.f32 %v561, %v739
      %v752 = vadd.f32 %v564, %v742
      %v753 = vadd.f32 %v566, %v744
      %s754 = scalar_lea.vmem %s2, 2
      %v755 = vld [vmem:[%s754] sm:$0x3]
      %v756 = vunpack.c.l.b16 %v581
      %v757 = vunpack.c.l.b16 %v595
      %v758 = vunpack.c.l.b16 %v609
      %v759 = vunpack.c.l.b16 %v623
      %v760 = vunpack.c.l.b16 %v637
      %v761 = vunpack.c.l.b16 %v651
      %v762 = vunpack.c.l.b16 %v665
      %v763 = vunpack.c.l.b16 %v679
      %v764 = vpack.c.b16 %v757, %v756
      %v765 = vpack.c.b16 %v759, %v758
      %v766 = vpack.c.b16 %v761, %v760
      %v767 = vpack.c.b16 %v763, %v762
      %v769 = vsel %vm456, %v764, 0
      %v772 = vsel %vm456, %v765, 0
      %v775 = vsel %vm456, %v766, 0
      %v778 = vsel %vm456, %v767, 0
      %v781 = vsel %vm469, %v755, 0
      %783 = vmatpush.bf16.msra.mxu0 0
      %784 = vmatpush.bf16.msra.mxu0 0
      %785 = vmatpush.bf16.msra.mxu0 0
      %786 = vmatpush.bf16.msra.mxu0 0
      %787 = vmatpush.bf16.msra.mxu0 0
      %788 = vmatpush.bf16.msra.mxu0 0
      %789 = vmatpush.bf16.msra.mxu0 0
      %790 = vmatpush.bf16.msra.mxu0 %v781
      %791 = vmatmul.bf16.gmra.mxu0 %v769
      %v792 = vpop.f32.mrf.mxu0
      %v793 = vadd.f32 0.0, %v792
      %v794 = vpop.f32.mrf.mxu0
      %v795 = vadd.f32 0.0, %v794
      %796 = vmatmul.bf16.gmra.mxu0 %v772
      %v797 = vpop.f32.mrf.mxu0
      %v798 = vadd.f32 0.0, %v797
      %v799 = vpop.f32.mrf.mxu0
      %v800 = vadd.f32 0.0, %v799
      %801 = vmatmul.bf16.gmra.mxu0 %v775
      %v802 = vpop.f32.mrf.mxu0
      %v803 = vadd.f32 0.0, %v802
      %v804 = vpop.f32.mrf.mxu0
      %v805 = vadd.f32 0.0, %v804
      %806 = vmatmul.bf16.gmra.mxu0 %v778
      %v807 = vpop.f32.mrf.mxu0
      %v808 = vadd.f32 0.0, %v807
      %v809 = vpop.f32.mrf.mxu0
      %v810 = vadd.f32 0.0, %v809
      %811 = vdwg.mxu0
      %v812 = vadd.f32 %v746, %v793
      %v813 = vadd.f32 %v747, %v795
      %v814 = vadd.f32 %v748, %v798
      %v815 = vadd.f32 %v749, %v800
      %v816 = vadd.f32 %v750, %v803
      %v817 = vadd.f32 %v751, %v805
      %v818 = vadd.f32 %v752, %v808
      %v819 = vadd.f32 %v753, %v810
      %v821 = vshrl.u32 %v325, 16
      %v823 = vrot.slane %v821, 4
      %v824 = vshll.u32 %v325, 16
      %v826 = vrot.slane %v824, 5
      %v827 = vor.u32 %v823, %v826
      %v828 = vrot.slane %v827, 4
      %v830 = vshll.u32 %v326, 16
      %v832 = vrot.slane %v830, 5
      %v833 = vsel %vm329, %v828, %v832
      %s834 = scalar_lea.vmem %s1, 8
      %v835 = vld [vmem:[%s834] sm:$0xf]
      %v837 = vunpack.c.l.b16 %v325
      %v838 = vpack.c.b16 %v512, %v511
      %v839 = vpack.c.b16 %v514, %v513
      %v840 = vpack.c.b16 %v516, %v515
      %v841 = vpack.c.b16 %v837, %v517
      %v843 = vsel %vm522, %v838, 0
      %v846 = vsel %vm522, %v839, 0
      %v849 = vsel %vm522, %v840, 0
      %v852 = vsel %vm522, %v841, 0
      %v855 = vsel %vm535, %v835, 0
      %857 = vmatpush.bf16.msra.mxu0 0
      %858 = vmatpush.bf16.msra.mxu0 0
      %859 = vmatpush.bf16.msra.mxu0 0
      %860 = vmatpush.bf16.msra.mxu0 0
      %861 = vmatpush.bf16.msra.mxu0 0
      %862 = vmatpush.bf16.msra.mxu0 0
      %863 = vmatpush.bf16.msra.mxu0 0
      %864 = vmatpush.bf16.msra.mxu0 %v855
      %865 = vmatmul.bf16.gmra.mxu0 %v843
      %v866 = vpop.f32.mrf.mxu0
      %v867 = vadd.f32 0.0, %v866
      %v868 = vpop.f32.mrf.mxu0
      %v869 = vadd.f32 0.0, %v868
      %870 = vmatmul.bf16.gmra.mxu0 %v846
      %v871 = vpop.f32.mrf.mxu0
      %v872 = vadd.f32 0.0, %v871
      %v873 = vpop.f32.mrf.mxu0
      %v874 = vadd.f32 0.0, %v873
      %875 = vmatmul.bf16.gmra.mxu0 %v849
      %v876 = vpop.f32.mrf.mxu0
      %v877 = vadd.f32 0.0, %v876
      %v878 = vpop.f32.mrf.mxu0
      %v879 = vadd.f32 0.0, %v878
      %880 = vmatmul.bf16.gmra.mxu0 %v852
      %v881 = vpop.f32.mrf.mxu0
      %v882 = vadd.f32 0.0, %v881
      %v883 = vpop.f32.mrf.mxu0
      %v884 = vadd.f32 0.0, %v883
      %885 = vdwg.mxu0
      %v886 = vadd.f32 %v812, %v867
      %v887 = vadd.f32 %v813, %v869
      %v888 = vadd.f32 %v814, %v872
      %v889 = vadd.f32 %v815, %v874
      %v890 = vadd.f32 %v816, %v877
      %v891 = vadd.f32 %v817, %v879
      %v892 = vadd.f32 %v818, %v882
      %v893 = vadd.f32 %v819, %v884
      %s894 = scalar_lea.vmem %s2, 4
      %v895 = vld [vmem:[%s894] sm:$0x3]
      %v896 = vunpack.c.l.b16 %v833
      %v897 = vpack.c.b16 %v446, %v445
      %v898 = vpack.c.b16 %v448, %v447
      %v899 = vpack.c.b16 %v450, %v449
      %v900 = vpack.c.b16 %v896, %v451
      %v902 = vsel %vm456, %v897, 0
      %v905 = vsel %vm456, %v898, 0
      %v908 = vsel %vm456, %v899, 0
      %v911 = vsel %vm456, %v900, 0
      %v914 = vsel %vm469, %v895, 0
      %916 = vmatpush.bf16.msra.mxu0 0
      %917 = vmatpush.bf16.msra.mxu0 0
      %918 = vmatpush.bf16.msra.mxu0 0
      %919 = vmatpush.bf16.msra.mxu0 0
      %920 = vmatpush.bf16.msra.mxu0 0
      %921 = vmatpush.bf16.msra.mxu0 0
      %922 = vmatpush.bf16.msra.mxu0 0
      %923 = vmatpush.bf16.msra.mxu0 %v914
      %924 = vmatmul.bf16.gmra.mxu0 %v902
      %v925 = vpop.f32.mrf.mxu0
      %v926 = vadd.f32 0.0, %v925
      %v927 = vpop.f32.mrf.mxu0
      %v928 = vadd.f32 0.0, %v927
      %929 = vmatmul.bf16.gmra.mxu0 %v905
      %v930 = vpop.f32.mrf.mxu0
      %v931 = vadd.f32 0.0, %v930
      %v932 = vpop.f32.mrf.mxu0
      %v933 = vadd.f32 0.0, %v932
      %934 = vmatmul.bf16.gmra.mxu0 %v908
      %v935 = vpop.f32.mrf.mxu0
      %v936 = vadd.f32 0.0, %v935
      %v937 = vpop.f32.mrf.mxu0
      %v938 = vadd.f32 0.0, %v937
      %939 = vmatmul.bf16.gmra.mxu0 %v911
      %v940 = vpop.f32.mrf.mxu0
      %v941 = vadd.f32 0.0, %v940
      %v942 = vpop.f32.mrf.mxu0
      %v943 = vadd.f32 0.0, %v942
      %944 = vdwg.mxu0
      %v945 = vadd.f32 %v886, %v926
      %v946 = vadd.f32 %v887, %v928
      %v947 = vadd.f32 %v888, %v931
      %v948 = vadd.f32 %v889, %v933
      %v949 = vadd.f32 %v890, %v936
      %v950 = vadd.f32 %v891, %v938
      %v951 = vadd.f32 %v892, %v941
      %v952 = vadd.f32 %v893, %v943
      %v953 = vld [vmem:[%s3] sm:$0x1]
      %v955 = vperm.slane %v953, 0
      %v957 = vadd.f32 %v945, %v955
      %v958 = vadd.f32 %v946, %v955
      %v959 = vadd.f32 %v947, %v955
      %v960 = vadd.f32 %v948, %v955
      %v961 = vadd.f32 %v949, %v955
      %v962 = vadd.f32 %v950, %v955
      %v963 = vadd.f32 %v951, %v955
      %v964 = vadd.f32 %v952, %v955
      %v965 = vmax.f32 %v957, 0.0
      %v966 = vmax.f32 %v958, 0.0
      %v967 = vmax.f32 %v959, 0.0
      %v968 = vmax.f32 %v960, 0.0
      %v969 = vmax.f32 %v961, 0.0
      %v970 = vmax.f32 %v962, 0.0
      %v971 = vmax.f32 %v963, 0.0
      %v972 = vmax.f32 %v964, 0.0
      %v973 = vpack.c.bf16 %v965, %v965
      %v974 = vpack.c.bf16 %v966, %v966
      %v975 = vpack.c.bf16 %v967, %v967
      %v976 = vpack.c.bf16 %v968, %v968
      %v977 = vpack.c.bf16 %v969, %v969
      %v978 = vpack.c.bf16 %v970, %v970
      %v979 = vpack.c.bf16 %v971, %v971
      %v980 = vpack.c.bf16 %v972, %v972
      %vm981 = vcmask 257024
      %982 = vst.msk [vmem:[%s286] sm:$0xf] %vm981, %v973
      %983 = vst.msk [vmem:[%s286 + $0x4] sm:$0xf] %vm981, %v974
      %984 = vst.msk [vmem:[%s286 + $0x8] sm:$0xf] %vm981, %v975
      %985 = vst.msk [vmem:[%s286 + $0xc] sm:$0xf] %vm981, %v976
      %986 = vst.msk [vmem:[%s286 + $0x10] sm:$0xf] %vm981, %v977
      %987 = vst.msk [vmem:[%s286 + $0x14] sm:$0xf] %vm981, %v978
      %988 = vst.msk [vmem:[%s286 + $0x18] sm:$0xf] %vm981, %v979
      %989 = vst.msk [vmem:[%s286 + $0x1c] sm:$0xf] %vm981, %v980
      %v990 = vld [vmem:[%s4] sm:$0xf]
      %v991 = vld [vmem:[%s4 + $0x4] sm:$0xf]
      %v992 = vld [vmem:[%s4 + $0x8] sm:$0xf]
      %v993 = vld [vmem:[%s4 + $0xc] sm:$0xf]
      %v994 = vld [vmem:[%s5] sm:$0x1]
      %v996 = vperm.slane %v994, 0
      %v1006 = vunpack.c.l.b16 %v973
      %v1007 = vunpack.c.l.b16 %v974
      %v1008 = vunpack.c.l.b16 %v975
      %v1009 = vunpack.c.l.b16 %v976
      %v1010 = vunpack.c.l.b16 %v977
      %v1011 = vunpack.c.l.b16 %v978
      %v1012 = vunpack.c.l.b16 %v979
      %v1013 = vunpack.c.l.b16 %v980
      %v1014 = vpack.c.b16 %v1007, %v1006
      %v1015 = vpack.c.b16 %v1009, %v1008
      %v1016 = vpack.c.b16 %v1011, %v1010
      %v1017 = vpack.c.b16 %v1013, %v1012
      %v1022 = vunpack.c.l.b16 %v990
      %v1023 = vunpack.c.l.b16 %v991
      %v1024 = vunpack.c.l.b16 %v992
      %v1025 = vunpack.c.l.b16 %v993
      %v1026 = vpack.c.b16 %v1023, %v1022
      %v1027 = vpack.c.b16 %v1025, %v1024
      %vm1030 = vcmask 261120
      %v1032 = vsel %vm1030, %v1014, 0
      %v1035 = vsel %vm1030, %v1015, 0
      %v1038 = vsel %vm1030, %v1016, 0
      %v1041 = vsel %vm1030, %v1017, 0
      %1043 = vmatpush.bf16.msra.mxu0 0
      %1044 = vmatpush.bf16.msra.mxu0 0
      %1045 = vmatpush.bf16.msra.mxu0 0
      %1046 = vmatpush.bf16.msra.mxu0 0
      %1047 = vmatpush.bf16.msra.mxu0 0
      %1048 = vmatpush.bf16.msra.mxu0 0
      %1049 = vmatpush.bf16.msra.mxu0 %v1027
      %1050 = vmatpush.bf16.msra.mxu0 %v1026
      %1051 = vmatmul.bf16.gmra.mxu0 %v1032
      %v1052 = vpop.f32.mrf.mxu0
      %v1053 = vadd.f32 %v996, %v1052
      %v1054 = vpop.f32.mrf.mxu0
      %v1055 = vadd.f32 %v996, %v1054
      %1056 = vmatmul.bf16.gmra.mxu0 %v1035
      %v1057 = vpop.f32.mrf.mxu0
      %v1058 = vadd.f32 %v996, %v1057
      %v1059 = vpop.f32.mrf.mxu0
      %v1060 = vadd.f32 %v996, %v1059
      %1061 = vmatmul.bf16.gmra.mxu0 %v1038
      %v1062 = vpop.f32.mrf.mxu0
      %v1063 = vadd.f32 %v996, %v1062
      %v1064 = vpop.f32.mrf.mxu0
      %v1065 = vadd.f32 %v996, %v1064
      %1066 = vmatmul.bf16.gmra.mxu0 %v1041
      %v1067 = vpop.f32.mrf.mxu0
      %v1068 = vadd.f32 %v996, %v1067
      %v1069 = vpop.f32.mrf.mxu0
      %v1070 = vadd.f32 %v996, %v1069
      %1071 = vdwg.mxu0
      %v1072 = vmax.f32 %v1053, 0.0
      %v1073 = vmax.f32 %v1055, 0.0
      %v1074 = vmax.f32 %v1058, 0.0
      %v1075 = vmax.f32 %v1060, 0.0
      %v1076 = vmax.f32 %v1063, 0.0
      %v1077 = vmax.f32 %v1065, 0.0
      %v1078 = vmax.f32 %v1068, 0.0
      %v1079 = vmax.f32 %v1070, 0.0
      %v1080 = vpack.c.bf16 %v1072, %v1072
      %v1081 = vpack.c.bf16 %v1073, %v1073
      %v1082 = vpack.c.bf16 %v1074, %v1074
      %v1083 = vpack.c.bf16 %v1075, %v1075
      %v1084 = vpack.c.bf16 %v1076, %v1076
      %v1085 = vpack.c.bf16 %v1077, %v1077
      %v1086 = vpack.c.bf16 %v1078, %v1078
      %v1087 = vpack.c.bf16 %v1079, %v1079
      %vm1088 = vcmask 125952
      %1089 = vst.msk [vmem:[%s291] sm:$0xf] %vm1088, %v1080
      %1090 = vst.msk [vmem:[%s291 + $0x4] sm:$0xf] %vm1088, %v1081
      %1091 = vst.msk [vmem:[%s291 + $0x8] sm:$0xf] %vm1088, %v1082
      %1092 = vst.msk [vmem:[%s291 + $0xc] sm:$0xf] %vm1088, %v1083
      %1093 = vst.msk [vmem:[%s291 + $0x10] sm:$0xf] %vm1088, %v1084
      %1094 = vst.msk [vmem:[%s291 + $0x14] sm:$0xf] %vm1088, %v1085
      %1095 = vst.msk [vmem:[%s291 + $0x18] sm:$0xf] %vm1088, %v1086
      %1096 = vst.msk [vmem:[%s291 + $0x1c] sm:$0xf] %vm1088, %v1087
      %p1097 = scmp.lt.s32.totalorder %s19, 1
      %s1098 = scalar_select %p1097, %s19, 1
      %s1099 = smul.addr %s1098, 8
      %s1100 = smul.addr %s1099, 4
      %s1101 = scalar_lea.vmem %s6, %s1100
      %p1102 = scmp.lt.s32.totalorder %s19, 1
      %s1103 = scalar_select %p1102, %s19, 1
      %s1104 = smul.addr %s1103, 8
      %s1105 = smul.addr %s1104, 4
      %s1106 = scalar_lea.vmem %s7, %s1105
      // Predicated region
      $region45: #{stem_block.3} parent=43 // pred_check
        %p1107 = pneg %p168
      $region46: #{stem_block.3} parent=43 // pred_check_branch
        %1109 = sbr.rel (%p1107) target = $region48
      $region47: #{stem_block.3} parent=43 // pred_region
        _
      $region48: #{stem_block.3} parent=43 // pred_fallthru
        _
      // Predicated region
      $region49: #{stem_block.3} parent=43 // pred_check
        %p1110 = pneg %p194
      $region50: #{stem_block.3} parent=43 // pred_check_branch
        %1112 = sbr.rel (%p1110) target = $region52
      $region51: #{stem_block.3} parent=43 // pred_region
        _
      $region52: #{stem_block.3} parent=43 // pred_fallthru
        _
    $region44: #{stem_block.3} parent=5 // pred_fallthru
      _
    %p1113 = scmp.le.s32.totalorder 2, %s14
    // Predicated region
    $region53: #{stem_block.3} parent=5 // pred_check
      %p1114 = pneg %p1113
    $region54: #{stem_block.3} parent=5 // pred_check_branch
      %1116 = sbr.rel (%p1114) target = $region56
    $region55: #{stem_block.3} parent=5 // pred_region
      %s1117 = ssub.s32 %s14, 2
      // Predicated region
      $region57: #{stem_block.3} parent=55 // pred_check
        %p1118 = pneg %p174
      $region58: #{stem_block.3} parent=55 // pred_check_branch
        %1120 = sbr.rel (%p1118) target = $region60
      $region59: #{stem_block.3} parent=55 // pred_region
        %p1121 = scmp.lt.s32.totalorder %s20, 1
        %s1122 = scalar_select %p1121, %s20, 1
        %s1123 = smul.addr %s1122, 8
        %s1124 = smul.addr %s1123, 4
        %s1125 = scalar_lea.vmem %s6, %s1124
      $region60: #{stem_block.3} parent=55 // pred_fallthru
        _
      // Predicated region
      $region61: #{stem_block.3} parent=55 // pred_check
        %p1126 = pneg %p200
      $region62: #{stem_block.3} parent=55 // pred_check_branch
        %1128 = sbr.rel (%p1126) target = $region64
      $region63: #{stem_block.3} parent=55 // pred_region
        %p1129 = scmp.lt.s32.totalorder %s20, 1
        %s1130 = scalar_select %p1129, %s20, 1
        %s1131 = smul.addr %s1130, 8
        %s1132 = smul.addr %s1131, 4
        %s1133 = scalar_lea.vmem %s7, %s1132
      $region64: #{stem_block.3} parent=55 // pred_fallthru
        _
    $region56: #{stem_block.3} parent=5 // pred_fallthru
      _
  $region6: #{stem_block.3} parent=0 // loop_footer
    %s18 = sadd.s32 1, %s14
  $region7: #{stem_block.3} parent=0 // loop_footer_branch
    %13 = sbr.rel target = $region3
  $region8: #{stem_block.3} parent=0 // loop_exit
    _

</llo_original>
